<compile_context>
chip_gen: v5e
topology: v5e:2x2
jax: 0.10.0
libtpu: 0.0.40
codegen_flags: <defaults>
</compile_context>

<pallas_src>
import jax
import jax.numpy as jnp
from jax.experimental import pallas as pl
from jax.experimental.pallas import tpu as pltpu

LANE = 128
SUBLANE = 8
BF16 = jnp.bfloat16


def _relu6(x):
    return jnp.clip(x, 0.0, 6.0)


def _round_up(n, m):
    return ((n + m - 1) // m) * m


# ---------------------------------------------------------------------------
# Kernel: fused 4-matmul MLP over one (TB, K) row tile of the batch.
# Weights (bf16) and biases (f32) are VMEM-resident across all grid steps.
# ---------------------------------------------------------------------------
def classifier_kernel(x_ref,
                      w1_ref, b1_ref,     # Linear(input_dim, hidden) + ReLU6
                      w2_ref, b2_ref,     # [BN-folded] Linear(hidden, 512) + ReLU6
                      w3_ref, b3_ref,     # [BN-folded] Linear(512, hidden) + ReLU6
                      w4_ref, b4_ref,     # Linear(hidden, output_pad)
                      o_ref):
    x = x_ref[...].astype(BF16)
    h = _relu6(jnp.dot(x, w1_ref[...],
                       preferred_element_type=jnp.float32) + b1_ref[...])
    h = _relu6(jnp.dot(h.astype(BF16), w2_ref[...],
                       preferred_element_type=jnp.float32) + b2_ref[...])
    h = _relu6(jnp.dot(h.astype(BF16), w3_ref[...],
                       preferred_element_type=jnp.float32) + b3_ref[...])
    o_ref[...] = jnp.dot(h.astype(BF16), w4_ref[...],
                         preferred_element_type=jnp.float32) + b4_ref[...]


# ---------------------------------------------------------------------------
# Parameters (PyTorch-equivalent, unfolded / unpadded, f32) — used by the ref.
# ---------------------------------------------------------------------------
def make_params(key, input_dim, hidden_dim, output_dim, bb_inner=512):
    ks = jax.random.split(key, 4)

    def lin(k, fan_in, fan_out):
        bound = 1.0 / jnp.sqrt(fan_in)
        kw, kb = jax.random.split(k)
        # stored already transposed: (in, out)  ->  y = x @ W + b
        w = jax.random.uniform(kw, (fan_in, fan_out), jnp.float32, -bound, bound)
        b = jax.random.uniform(kb, (1, fan_out), jnp.float32, -bound, bound)
        return w, b

    w1, b1 = lin(ks[0], input_dim, hidden_dim)          # fc Linear #1
    bb_w1, bb_b1 = lin(ks[1], hidden_dim, bb_inner)     # BasicBlock Linear(hidden, 512)
    bb_w2, bb_b2 = lin(ks[2], bb_inner, hidden_dim)     # BasicBlock Linear(512, hidden)
    w_out, b_out = lin(ks[3], hidden_dim, output_dim)   # final Linear

    eps = 1e-5
    # BatchNorm1d eval fold: y = (x - rm)/sqrt(rv+eps)*gamma + beta
    def bn_fold(dim):
        gamma = jnp.ones((dim,), jnp.float32)
        beta = jnp.zeros((dim,), jnp.float32)
        rm = jnp.zeros((dim,), jnp.float32)
        rv = jnp.ones((dim,), jnp.float32)
        scale = gamma / jnp.sqrt(rv + eps)
        shift = beta - rm * scale
        return scale.reshape(1, dim), shift.reshape(1, dim)

    bb_s1, bb_t1 = bn_fold(hidden_dim)
    bb_s2, bb_t2 = bn_fold(bb_inner)

    return dict(w1=w1, b1=b1,
                bb_s1=bb_s1, bb_t1=bb_t1, bb_w1=bb_w1, bb_b1=bb_b1,
                bb_s2=bb_s2, bb_t2=bb_t2, bb_w2=bb_w2, bb_b2=bb_b2,
                w_out=w_out, b_out=b_out)


# ---------------------------------------------------------------------------
# One-time wrapper-side precompute: BN->Linear fold, output lane padding to
# 128, and bf16 weight cast (biases stay f32 for the f32 bias-add path).
# ---------------------------------------------------------------------------
def fold_and_pad(p, input_dim, output_dim):
    # Fold BN scale/shift into the following Linear: W' = diag(s) @ W, b' = t @ W + b
    w2 = p["bb_s1"].reshape(-1, 1) * p["bb_w1"]
    b2 = p["bb_t1"] @ p["bb_w1"] + p["bb_b1"]
    w3 = p["bb_s2"].reshape(-1, 1) * p["bb_w2"]
    b3 = p["bb_t2"] @ p["bb_w2"] + p["bb_b2"]

    # Pad only the OUTPUT lane dim (N) to a multiple of 128 so the final store
    # is unmasked; x and w1 keep the true contraction dim K = input_dim.
    n_pad = _round_up(output_dim, LANE)
    w4 = jnp.pad(p["w_out"], ((0, 0), (0, n_pad - output_dim)))
    b4 = jnp.pad(p["b_out"], ((0, 0), (0, n_pad - output_dim)))

    return dict(w1=p["w1"].astype(BF16), b1=p["b1"],
                w2=w2.astype(BF16), b2=b2,
                w3=w3.astype(BF16), b3=b3,
                w4=w4.astype(BF16), b4=b4)


def _choose_tb(batch, tb_target, min_grid_steps=2):
    """Batch tile: big enough to hide per-step overhead, but keep >= 2 grid
    steps when possible so both v7x TensorCores get work ('parallel' axis)."""
    batch8 = _round_up(batch, SUBLANE)
    tb = max(SUBLANE, min(_round_up(tb_target, SUBLANE), batch8))
    while pl.cdiv(batch8, tb) < min_grid_steps and tb > SUBLANE:
        tb = max(SUBLANE, _round_up(tb // 2, SUBLANE))
    return tb


# ---------------------------------------------------------------------------
# Pallas wrapper: batch-tiled grid, weights resident, lane-dense output.
# ---------------------------------------------------------------------------
def classifier_forward(x, fp, output_dim, *, tb=512):
    batch, in_dim = x.shape
    hidden = fp["w1"].shape[1]
    inner = fp["w2"].shape[1]
    n_pad = fp["w4"].shape[1]

    tb = _choose_tb(batch, tb)
    batch_pad = _round_up(batch, tb)
    if batch_pad != batch:
        x = jnp.pad(x, ((0, batch_pad - batch), (0, 0)))

    grid = (batch_pad // tb,)

    row_map = lambda i: (i, 0)     # x / o tiles advance along the batch
    const_map = lambda i: (0, 0)   # weights & biases stay VMEM-resident

    weight_args = (fp["w1"], fp["b1"], fp["w2"], fp["b2"],
                   fp["w3"], fp["b3"], fp["w4"], fp["b4"])
    weight_specs = [pl.BlockSpec(w.shape, const_map) for w in weight_args]
    weight_bytes = sum(int(w.size) * w.dtype.itemsize for w in weight_args)

    cost = pl.CostEstimate(
        flops=2 * batch_pad * (in_dim * hidden + hidden * inner
                               + inner * hidden + hidden * n_pad),
        transcendentals=0,
        bytes_accessed=int(x.size) * 4 + batch_pad * n_pad * 4 + weight_bytes,
    )

    out = pl.pallas_call(
        classifier_kernel,
        out_shape=jax.ShapeDtypeStruct((batch_pad, n_pad), jnp.float32),
        grid=grid,
        # x block: (tb, in_dim) — last dim equals the full array dim, so the
        # (8,128) rule is satisfied without padding K up to 128.
        in_specs=[pl.BlockSpec((tb, in_dim), row_map)] + weight_specs,
        out_specs=pl.BlockSpec((tb, n_pad), row_map),
        compiler_params=pltpu.CompilerParams(
            dimension_semantics=("parallel",)),
        cost_estimate=cost,
    )(x, *weight_args)

    # Strip batch padding and the zero-padded logit columns.
    # (If the caller can consume padded logits, return `out` directly.)
    return out[:batch, :output_dim]


# ---------------------------------------------------------------------------
# Pure-JAX f32 reference (mirrors the PyTorch eval-mode forward, unfolded).
# ---------------------------------------------------------------------------
def classifier_reference(x, p):
    h = _relu6(x @ p["w1"] + p["b1"])
    h = h * p["bb_s1"] + p["bb_t1"]          # BatchNorm1d (eval) ; Dropout = id
    h = _relu6(h @ p["bb_w1"] + p["bb_b1"])
    h = h * p["bb_s2"] + p["bb_t2"]          # BatchNorm1d (eval) ; Dropout = id
    h = _relu6(h @ p["bb_w2"] + p["bb_b2"])
    return h @ p["w_out"] + p["b_out"]


if __name__ == "__main__":
    # Small shapes consistent with the module (hidden_layers=1, BasicBlock
    # inner=512, output_dim=41). batch=256 exercises a 2-step batch grid.
    batch, input_dim, hidden_dim, output_dim = 256, 32, 128, 41

    key = jax.random.PRNGKey(0)
    k_x, k_p = jax.random.split(key)
    x = jax.random.normal(k_x, (batch, input_dim), jnp.float32)
    params = make_params(k_p, input_dim, hidden_dim, output_dim)
    folded = fold_and_pad(params, input_dim, output_dim)

    out = classifier_forward(x, folded, output_dim, tb=512)
    out = jax.block_until_ready(out)

    ref = classifier_reference(x, params)
    assert out.shape == (batch, output_dim)
    # bf16 MXU operands => relaxed tolerance vs the f32 reference.
    assert jnp.allclose(out, ref, atol=5e-2, rtol=5e-2), "mismatch vs JAX reference"

    print("KERNEL_OK")
</pallas_src>

<mosaic_0001>
module attributes {stable_mosaic.version = 11 : i64} {
  func.func @classifier_kernel(%arg0: i32, %arg1: memref<128x32xf32, #tpu.memory_space<vmem>>, %arg2: memref<32x128xbf16, #tpu.memory_space<vmem>>, %arg3: memref<1x128xf32, #tpu.memory_space<vmem>>, %arg4: memref<128x512xbf16, #tpu.memory_space<vmem>>, %arg5: memref<1x512xf32, #tpu.memory_space<vmem>>, %arg6: memref<512x128xbf16, #tpu.memory_space<vmem>>, %arg7: memref<1x128xf32, #tpu.memory_space<vmem>>, %arg8: memref<128x128xbf16, #tpu.memory_space<vmem>>, %arg9: memref<1x128xf32, #tpu.memory_space<vmem>>, %arg10: memref<128x128xf32, #tpu.memory_space<vmem>>) attributes {dimension_semantics = [#tpu.dimension_semantics<parallel>], iteration_bounds = array<i64: 2>, scalar_prefetch = 0 : i64, scratch_operands = 0 : i64, tpu.core_type = #tpu.core_type<tc>, window_params = [{transform_indices = @transform_0, window_bounds = array<i64: 128, 32>}, {pipeline_mode = #tpu.pipeline_mode<synchronous>, transform_indices = @transform_1, window_bounds = array<i64: 32, 128>}, {pipeline_mode = #tpu.pipeline_mode<synchronous>, transform_indices = @transform_2, window_bounds = array<i64: 1, 128>}, {pipeline_mode = #tpu.pipeline_mode<synchronous>, transform_indices = @transform_3, window_bounds = array<i64: 128, 512>}, {pipeline_mode = #tpu.pipeline_mode<synchronous>, transform_indices = @transform_4, window_bounds = array<i64: 1, 512>}, {pipeline_mode = #tpu.pipeline_mode<synchronous>, transform_indices = @transform_5, window_bounds = array<i64: 512, 128>}, {pipeline_mode = #tpu.pipeline_mode<synchronous>, transform_indices = @transform_6, window_bounds = array<i64: 1, 128>}, {pipeline_mode = #tpu.pipeline_mode<synchronous>, transform_indices = @transform_7, window_bounds = array<i64: 128, 128>}, {pipeline_mode = #tpu.pipeline_mode<synchronous>, transform_indices = @transform_8, window_bounds = array<i64: 1, 128>}, {transform_indices = @transform_9, window_bounds = array<i64: 128, 128>}]} {
    %c0 = arith.constant 0 : index
    %c0_0 = arith.constant 0 : index
    %0 = vector.load %arg1[%c0, %c0_0] : memref<128x32xf32, #tpu.memory_space<vmem>>, vector<128x32xf32>
    %1 = arith.truncf %0 : vector<128x32xf32> to vector<128x32xbf16>
    %c0_1 = arith.constant 0 : index
    %c0_2 = arith.constant 0 : index
    %2 = vector.load %arg2[%c0_1, %c0_2] : memref<32x128xbf16, #tpu.memory_space<vmem>>, vector<32x128xbf16>
    %cst = arith.constant dense<0.000000e+00> : vector<128x128xf32>
    %3 = tpu.matmul %1, %2, %cst {dimension_numbers = #tpu.dot_dimension_numbers<[1], [0], [0], [1], [0, 0, 1, 1], [], []>} : vector<128x32xbf16>, vector<32x128xbf16>, vector<128x128xf32> -> vector<128x128xf32>
    %c0_3 = arith.constant 0 : index
    %c0_4 = arith.constant 0 : index
    %4 = vector.load %arg3[%c0_3, %c0_4] : memref<1x128xf32, #tpu.memory_space<vmem>>, vector<1x128xf32>
    %5 = vector.broadcast %4 : vector<1x128xf32> to vector<128x128xf32>
    %6 = arith.addf %3, %5 : vector<128x128xf32>
    %cst_5 = arith.constant 0.000000e+00 : f32
    %cst_6 = arith.constant 6.000000e+00 : f32
    %7 = vector.broadcast %cst_5 : f32 to vector<128x128xf32>
    %8 = arith.maximumf %7, %6 : vector<128x128xf32>
    %9 = vector.broadcast %cst_6 : f32 to vector<128x128xf32>
    %10 = arith.minimumf %9, %8 : vector<128x128xf32>
    %11 = arith.truncf %10 : vector<128x128xf32> to vector<128x128xbf16>
    %c0_7 = arith.constant 0 : index
    %c0_8 = arith.constant 0 : index
    %12 = vector.load %arg4[%c0_7, %c0_8] : memref<128x512xbf16, #tpu.memory_space<vmem>>, vector<128x512xbf16>
    %cst_9 = arith.constant dense<0.000000e+00> : vector<128x512xf32>
    %13 = tpu.matmul %11, %12, %cst_9 {dimension_numbers = #tpu.dot_dimension_numbers<[1], [0], [0], [1], [0, 0, 1, 1], [], []>} : vector<128x128xbf16>, vector<128x512xbf16>, vector<128x512xf32> -> vector<128x512xf32>
    %c0_10 = arith.constant 0 : index
    %c0_11 = arith.constant 0 : index
    %14 = vector.load %arg5[%c0_10, %c0_11] : memref<1x512xf32, #tpu.memory_space<vmem>>, vector<1x512xf32>
    %15 = vector.broadcast %14 : vector<1x512xf32> to vector<128x512xf32>
    %16 = arith.addf %13, %15 : vector<128x512xf32>
    %cst_12 = arith.constant 0.000000e+00 : f32
    %cst_13 = arith.constant 6.000000e+00 : f32
    %17 = vector.broadcast %cst_12 : f32 to vector<128x512xf32>
    %18 = arith.maximumf %17, %16 : vector<128x512xf32>
    %19 = vector.broadcast %cst_13 : f32 to vector<128x512xf32>
    %20 = arith.minimumf %19, %18 : vector<128x512xf32>
    %21 = arith.truncf %20 : vector<128x512xf32> to vector<128x512xbf16>
    %c0_14 = arith.constant 0 : index
    %c0_15 = arith.constant 0 : index
    %22 = vector.load %arg6[%c0_14, %c0_15] : memref<512x128xbf16, #tpu.memory_space<vmem>>, vector<512x128xbf16>
    %cst_16 = arith.constant dense<0.000000e+00> : vector<128x128xf32>
    %23 = tpu.matmul %21, %22, %cst_16 {dimension_numbers = #tpu.dot_dimension_numbers<[1], [0], [0], [1], [0, 0, 1, 1], [], []>} : vector<128x512xbf16>, vector<512x128xbf16>, vector<128x128xf32> -> vector<128x128xf32>
    %c0_17 = arith.constant 0 : index
    %c0_18 = arith.constant 0 : index
    %24 = vector.load %arg7[%c0_17, %c0_18] : memref<1x128xf32, #tpu.memory_space<vmem>>, vector<1x128xf32>
    %25 = vector.broadcast %24 : vector<1x128xf32> to vector<128x128xf32>
    %26 = arith.addf %23, %25 : vector<128x128xf32>
    %cst_19 = arith.constant 0.000000e+00 : f32
    %cst_20 = arith.constant 6.000000e+00 : f32
    %27 = vector.broadcast %cst_19 : f32 to vector<128x128xf32>
    %28 = arith.maximumf %27, %26 : vector<128x128xf32>
    %29 = vector.broadcast %cst_20 : f32 to vector<128x128xf32>
    %30 = arith.minimumf %29, %28 : vector<128x128xf32>
    %31 = arith.truncf %30 : vector<128x128xf32> to vector<128x128xbf16>
    %c0_21 = arith.constant 0 : index
    %c0_22 = arith.constant 0 : index
    %32 = vector.load %arg8[%c0_21, %c0_22] : memref<128x128xbf16, #tpu.memory_space<vmem>>, vector<128x128xbf16>
    %cst_23 = arith.constant dense<0.000000e+00> : vector<128x128xf32>
    %33 = tpu.matmul %31, %32, %cst_23 {dimension_numbers = #tpu.dot_dimension_numbers<[1], [0], [0], [1], [0, 0, 1, 1], [], []>} : vector<128x128xbf16>, vector<128x128xbf16>, vector<128x128xf32> -> vector<128x128xf32>
    %c0_24 = arith.constant 0 : index
    %c0_25 = arith.constant 0 : index
    %34 = vector.load %arg9[%c0_24, %c0_25] : memref<1x128xf32, #tpu.memory_space<vmem>>, vector<1x128xf32>
    %35 = vector.broadcast %34 : vector<1x128xf32> to vector<128x128xf32>
    %36 = arith.addf %33, %35 : vector<128x128xf32>
    %c0_26 = arith.constant 0 : index
    %c0_27 = arith.constant 0 : index
    %37 = vector.load %arg10[%c0_26, %c0_27] : memref<128x128xf32, #tpu.memory_space<vmem>>, vector<128x128xf32>
    tpu.vector_store %arg10[%c0_26, %c0_27], %36 {strides = array<i32>} : memref<128x128xf32, #tpu.memory_space<vmem>>, vector<128x128xf32>,
    return
  }
  func.func @transform_0(%arg0: i32) -> (i32, i32) {
    %c0_i32 = arith.constant 0 : i32
    %c0_i32_0 = arith.constant 0 : i32
    return %arg0, %c0_i32 : i32, i32
  }
  func.func @transform_1(%arg0: i32) -> (i32, i32) {
    %c0_i32 = arith.constant 0 : i32
    %c0_i32_0 = arith.constant 0 : i32
    %c0_i32_1 = arith.constant 0 : i32
    return %c0_i32, %c0_i32_0 : i32, i32
  }
  func.func @transform_2(%arg0: i32) -> (i32, i32) {
    %c0_i32 = arith.constant 0 : i32
    %c0_i32_0 = arith.constant 0 : i32
    %c0_i32_1 = arith.constant 0 : i32
    return %c0_i32, %c0_i32_0 : i32, i32
  }
  func.func @transform_3(%arg0: i32) -> (i32, i32) {
    %c0_i32 = arith.constant 0 : i32
    %c0_i32_0 = arith.constant 0 : i32
    %c0_i32_1 = arith.constant 0 : i32
    return %c0_i32, %c0_i32_0 : i32, i32
  }
  func.func @transform_4(%arg0: i32) -> (i32, i32) {
    %c0_i32 = arith.constant 0 : i32
    %c0_i32_0 = arith.constant 0 : i32
    %c0_i32_1 = arith.constant 0 : i32
    return %c0_i32, %c0_i32_0 : i32, i32
  }
  func.func @transform_5(%arg0: i32) -> (i32, i32) {
    %c0_i32 = arith.constant 0 : i32
    %c0_i32_0 = arith.constant 0 : i32
    %c0_i32_1 = arith.constant 0 : i32
    return %c0_i32, %c0_i32_0 : i32, i32
  }
  func.func @transform_6(%arg0: i32) -> (i32, i32) {
    %c0_i32 = arith.constant 0 : i32
    %c0_i32_0 = arith.constant 0 : i32
    %c0_i32_1 = arith.constant 0 : i32
    return %c0_i32, %c0_i32_0 : i32, i32
  }
  func.func @transform_7(%arg0: i32) -> (i32, i32) {
    %c0_i32 = arith.constant 0 : i32
    %c0_i32_0 = arith.constant 0 : i32
    %c0_i32_1 = arith.constant 0 : i32
    return %c0_i32, %c0_i32_0 : i32, i32
  }
  func.func @transform_8(%arg0: i32) -> (i32, i32) {
    %c0_i32 = arith.constant 0 : i32
    %c0_i32_0 = arith.constant 0 : i32
    %c0_i32_1 = arith.constant 0 : i32
    return %c0_i32, %c0_i32_0 : i32, i32
  }
  func.func @transform_9(%arg0: i32) -> (i32, i32) {
    %c0_i32 = arith.constant 0 : i32
    %c0_i32_0 = arith.constant 0 : i32
    return %arg0, %c0_i32 : i32, i32
  }
}

</mosaic_0001>

<llo_original>
// kernel: tpu_custom_call.1
$region0: #{tpu_custom_call.1}
  #allocation0 [shape = 'u32[]', space=smem, size = 0x4, offset = 0x4, fixed_abs, tag = 'smem constant byte address 0x4 - core index']
  #allocation1 [shape = 'u32[72,128]{1,0:T(1,128)}', space=vmem, size = 0x9000, scoped, tag = 'internal scratch']
  %s0 = inlined_call_operand.vmem [shape: f32[256,32], index: 0, kind: input, shape index: {}]
  %s1 = inlined_call_operand.hbm [shape: bf16[32,128], index: 1, kind: input, shape index: {}]
  %s2 = inlined_call_operand.vmem [shape: f32[1,128], index: 2, kind: input, shape index: {}]
  %s3 = inlined_call_operand.vmem [shape: bf16[128,512], index: 3, kind: input, shape index: {}]
  %s4 = inlined_call_operand.hbm [shape: f32[1,512], index: 4, kind: input, shape index: {}]
  %s5 = inlined_call_operand.hbm [shape: bf16[512,128], index: 5, kind: input, shape index: {}]
  %s6 = inlined_call_operand.vmem [shape: f32[1,128], index: 6, kind: input, shape index: {}]
  %s7 = inlined_call_operand.vmem [shape: bf16[128,128], index: 7, kind: input, shape index: {}]
  %s8 = inlined_call_operand.vmem [shape: f32[1,128], index: 8, kind: input, shape index: {}]
  %s9 = inlined_call_operand.hbm [shape: f32[256,128], index: 9, kind: output, shape index: {}]
  %s10 = sld [smem:[#allocation0]]
  $region81: #{tpu_custom_call.1} parent=0
    _
  %s12 = ssub.s32 1, %s10
  %s13 = scalar_select 0, %s12, %s10
  $region1: #{tpu_custom_call.1} parent=0
    #allocation2 [shape = 'u8[8192]{0}', space=vmem, size = 0x2000, scoped, tag = 'input window, operand 1, single buffered']
    #allocation3 [shape = 's32[2]{0}', space=sflag, size = 0x8, scoped, tag = 'scoped memory for tpu_custom_call.1']
    #allocation4 [shape = 's32[2]{0}', space=sflag, size = 0x8, scoped, tag = 'scoped memory for tpu_custom_call.1']
    #allocation5 [shape = 'u8[2048]{0}', space=vmem, size = 0x800, scoped, tag = 'input window, operand 4, single buffered']
    #allocation6 [shape = 's32[1]{0}', space=sflag, size = 0x4, scoped, tag = 'scoped memory for tpu_custom_call.1']
    #allocation7 [shape = 'u8[131072]{0}', space=vmem, size = 0x20000, scoped, tag = 'input window, operand 5, single buffered']
    #allocation8 [shape = 'u8[131072]{0}', space=vmem, size = 0x20000, scoped, tag = 'output window, operand 0']
    %14 = vsyncpa [#allocation3], 0
    %15 = vsyncpa [#allocation6], 0
    %16 = vsyncpa [#allocation4], 0
    %s17 = scalar_lea.sflag [#allocation4], 1
    %18 = vsyncpa %s17, 0
    loop: start=0, step=1, limit=4
    $region2: #{tpu_custom_call.1} parent=1 // loop_pre_header
      _
    $region3: #{tpu_custom_call.1} parent=1 // loop_header
      %s20 = sphi 0, %s24
      %p21 = scmp.ge.s32.totalorder %s20, 4
      %s30 = sphi 0, %s32
      %s33 = sphi 0, %s30
      %s34 = sphi 0, %s33
      %s50 = sphi 0, %s34
      %s54 = sphi 0, %s54
      %s56 = sphi 0, %s54
      %s57 = sphi 0, %s56
      %s71 = sphi 0, %s57
      %s75 = sphi 0, %s75
      %s77 = sphi 0, %s75
      %s78 = sphi 0, %s77
      %s92 = sphi 0, %s78
      %s96 = sphi 0, %s96
      %s98 = sphi 0, %s96
      %s99 = sphi 0, %s98
      %s113 = sphi 0, %s99
      %s117 = sphi 0, %s117
      %s119 = sphi 0, %s117
      %s120 = sphi 0, %s119
      %s134 = sphi 0, %s120
      %s138 = sphi 0, %s138
      %s140 = sphi 0, %s138
      %s141 = sphi 0, %s140
      %s155 = sphi 0, %s141
      %s159 = sphi 0, %s159
      %s161 = sphi 0, %s159
      %s162 = sphi 0, %s161
      %s176 = sphi 0, %s162
      %s180 = sphi 0, %s180
      %s182 = sphi 0, %s180
      %s183 = sphi 0, %s182
      %s197 = sphi 0, %s183
      %s201 = sphi 0, %s201
      %s203 = sphi 0, %s201
      %s204 = sphi 0, %s203
      %s218 = sphi 0, %s204
      %s224 = sphi 0, %s226
      %s227 = sphi 0, %s224
      %s228 = sphi 0, %s227
      %s244 = sphi 0, %s228
    $region4: #{tpu_custom_call.1} parent=1 // loop_header_branch
      %23 = sbr.rel (%p21) target = $region8
    $region5: #{tpu_custom_call.1} parent=1 // loop_body
      %s25 = ssub.s32 %s20, 1
      %s26 = ssub.s32 %s20, 2
      %s27 = sadd.s32 %s20, 1
      %s28 = ssub.s32 %s20, %s27
      %p29 = scmp.eq.s32.totalorder %s28, 0
      %s31 = sadd.s32 %s30, 1
      %s32 = scalar_select %p29, %s30, %s31
      %p35 = pneg %p29
      %p36 = scmp.eq.s32.totalorder %s20, 1
      %p37 = por %p35, %p36
      %p38 = scmp.ne.s32.totalorder %s30, %s33
      %p39 = scmp.eq.s32.totalorder %s20, 0
      %p40 = por %p38, %p39
      %p41 = scmp.ne.s32.totalorder %s30, %s33
      %p42 = scmp.eq.s32.totalorder %s25, 1
      %p43 = por %p41, %p42
      %p44 = scmp.ne.s32.totalorder %s33, %s34
      %p45 = scmp.eq.s32.totalorder %s25, 0
      %p46 = por %p44, %p45
      %p47 = scmp.ne.s32.totalorder %s33, %s34
      %p48 = scmp.eq.s32.totalorder %s26, 1
      %p49 = por %p47, %p48
      %p51 = scmp.ne.s32.totalorder %s34, %s50
      %p52 = scmp.eq.s32.totalorder %s26, 0
      %p53 = por %p51, %p52
      %s55 = sadd.s32 %s54, 1
      %p58 = scmp.eq.s32.totalorder %s20, 1
      %p59 = scmp.ne.s32.totalorder %s54, %s56
      %p60 = scmp.eq.s32.totalorder %s20, 0
      %p61 = por %p59, %p60
      %p62 = scmp.ne.s32.totalorder %s54, %s56
      %p63 = scmp.eq.s32.totalorder %s25, 1
      %p64 = por %p62, %p63
      %p65 = scmp.ne.s32.totalorder %s56, %s57
      %p66 = scmp.eq.s32.totalorder %s25, 0
      %p67 = por %p65, %p66
      %p68 = scmp.ne.s32.totalorder %s56, %s57
      %p69 = scmp.eq.s32.totalorder %s26, 1
      %p70 = por %p68, %p69
      %p72 = scmp.ne.s32.totalorder %s57, %s71
      %p73 = scmp.eq.s32.totalorder %s26, 0
      %p74 = por %p72, %p73
      %s76 = sadd.s32 %s75, 1
      %p79 = scmp.eq.s32.totalorder %s20, 1
      %p80 = scmp.ne.s32.totalorder %s75, %s77
      %p81 = scmp.eq.s32.totalorder %s20, 0
      %p82 = por %p80, %p81
      %p83 = scmp.ne.s32.totalorder %s75, %s77
      %p84 = scmp.eq.s32.totalorder %s25, 1
      %p85 = por %p83, %p84
      %p86 = scmp.ne.s32.totalorder %s77, %s78
      %p87 = scmp.eq.s32.totalorder %s25, 0
      %p88 = por %p86, %p87
      %p89 = scmp.ne.s32.totalorder %s77, %s78
      %p90 = scmp.eq.s32.totalorder %s26, 1
      %p91 = por %p89, %p90
      %p93 = scmp.ne.s32.totalorder %s78, %s92
      %p94 = scmp.eq.s32.totalorder %s26, 0
      %p95 = por %p93, %p94
      %s97 = sadd.s32 %s96, 1
      %p100 = scmp.eq.s32.totalorder %s20, 1
      %p101 = scmp.ne.s32.totalorder %s96, %s98
      %p102 = scmp.eq.s32.totalorder %s20, 0
      %p103 = por %p101, %p102
      %p104 = scmp.ne.s32.totalorder %s96, %s98
      %p105 = scmp.eq.s32.totalorder %s25, 1
      %p106 = por %p104, %p105
      %p107 = scmp.ne.s32.totalorder %s98, %s99
      %p108 = scmp.eq.s32.totalorder %s25, 0
      %p109 = por %p107, %p108
      %p110 = scmp.ne.s32.totalorder %s98, %s99
      %p111 = scmp.eq.s32.totalorder %s26, 1
      %p112 = por %p110, %p111
      %p114 = scmp.ne.s32.totalorder %s99, %s113
      %p115 = scmp.eq.s32.totalorder %s26, 0
      %p116 = por %p114, %p115
      %s118 = sadd.s32 %s117, 1
      %p121 = scmp.eq.s32.totalorder %s20, 1
      %p122 = scmp.ne.s32.totalorder %s117, %s119
      %p123 = scmp.eq.s32.totalorder %s20, 0
      %p124 = por %p122, %p123
      %p125 = scmp.ne.s32.totalorder %s117, %s119
      %p126 = scmp.eq.s32.totalorder %s25, 1
      %p127 = por %p125, %p126
      %p128 = scmp.ne.s32.totalorder %s119, %s120
      %p129 = scmp.eq.s32.totalorder %s25, 0
      %p130 = por %p128, %p129
      %p131 = scmp.ne.s32.totalorder %s119, %s120
      %p132 = scmp.eq.s32.totalorder %s26, 1
      %p133 = por %p131, %p132
      %p135 = scmp.ne.s32.totalorder %s120, %s134
      %p136 = scmp.eq.s32.totalorder %s26, 0
      %p137 = por %p135, %p136
      %s139 = sadd.s32 %s138, 1
      %p142 = scmp.eq.s32.totalorder %s20, 1
      %p143 = scmp.ne.s32.totalorder %s138, %s140
      %p144 = scmp.eq.s32.totalorder %s20, 0
      %p145 = por %p143, %p144
      %p146 = scmp.ne.s32.totalorder %s138, %s140
      %p147 = scmp.eq.s32.totalorder %s25, 1
      %p148 = por %p146, %p147
      %p149 = scmp.ne.s32.totalorder %s140, %s141
      %p150 = scmp.eq.s32.totalorder %s25, 0
      %p151 = por %p149, %p150
      %p152 = scmp.ne.s32.totalorder %s140, %s141
      %p153 = scmp.eq.s32.totalorder %s26, 1
      %p154 = por %p152, %p153
      %p156 = scmp.ne.s32.totalorder %s141, %s155
      %p157 = scmp.eq.s32.totalorder %s26, 0
      %p158 = por %p156, %p157
      %s160 = sadd.s32 %s159, 1
      %p163 = scmp.eq.s32.totalorder %s20, 1
      %p164 = scmp.ne.s32.totalorder %s159, %s161
      %p165 = scmp.eq.s32.totalorder %s20, 0
      %p166 = por %p164, %p165
      %p167 = scmp.ne.s32.totalorder %s159, %s161
      %p168 = scmp.eq.s32.totalorder %s25, 1
      %p169 = por %p167, %p168
      %p170 = scmp.ne.s32.totalorder %s161, %s162
      %p171 = scmp.eq.s32.totalorder %s25, 0
      %p172 = por %p170, %p171
      %p173 = scmp.ne.s32.totalorder %s161, %s162
      %p174 = scmp.eq.s32.totalorder %s26, 1
      %p175 = por %p173, %p174
      %p177 = scmp.ne.s32.totalorder %s162, %s176
      %p178 = scmp.eq.s32.totalorder %s26, 0
      %p179 = por %p177, %p178
      %s181 = sadd.s32 %s180, 1
      %p184 = scmp.eq.s32.totalorder %s20, 1
      %p185 = scmp.ne.s32.totalorder %s180, %s182
      %p186 = scmp.eq.s32.totalorder %s20, 0
      %p187 = por %p185, %p186
      %p188 = scmp.ne.s32.totalorder %s180, %s182
      %p189 = scmp.eq.s32.totalorder %s25, 1
      %p190 = por %p188, %p189
      %p191 = scmp.ne.s32.totalorder %s182, %s183
      %p192 = scmp.eq.s32.totalorder %s25, 0
      %p193 = por %p191, %p192
      %p194 = scmp.ne.s32.totalorder %s182, %s183
      %p195 = scmp.eq.s32.totalorder %s26, 1
      %p196 = por %p194, %p195
      %p198 = scmp.ne.s32.totalorder %s183, %s197
      %p199 = scmp.eq.s32.totalorder %s26, 0
      %p200 = por %p198, %p199
      %s202 = sadd.s32 %s201, 1
      %p205 = scmp.eq.s32.totalorder %s20, 1
      %p206 = scmp.ne.s32.totalorder %s201, %s203
      %p207 = scmp.eq.s32.totalorder %s20, 0
      %p208 = por %p206, %p207
      %p209 = scmp.ne.s32.totalorder %s201, %s203
      %p210 = scmp.eq.s32.totalorder %s25, 1
      %p211 = por %p209, %p210
      %p212 = scmp.ne.s32.totalorder %s203, %s204
      %p213 = scmp.eq.s32.totalorder %s25, 0
      %p214 = por %p212, %p213
      %p215 = scmp.ne.s32.totalorder %s203, %s204
      %p216 = scmp.eq.s32.totalorder %s26, 1
      %p217 = por %p215, %p216
      %p219 = scmp.ne.s32.totalorder %s204, %s218
      %p220 = scmp.eq.s32.totalorder %s26, 0
      %p221 = por %p219, %p220
      %s222 = ssub.s32 %s20, %s27
      %p223 = scmp.eq.s32.totalorder %s222, 0
      %s225 = sadd.s32 %s224, 1
      %s226 = scalar_select %p223, %s224, %s225
      %p229 = pneg %p223
      %p230 = scmp.eq.s32.totalorder %s20, 1
      %p231 = por %p229, %p230
      %p232 = scmp.ne.s32.totalorder %s224, %s227
      %p233 = scmp.eq.s32.totalorder %s20, 0
      %p234 = por %p232, %p233
      %p235 = scmp.ne.s32.totalorder %s224, %s227
      %p236 = scmp.eq.s32.totalorder %s25, 1
      %p237 = por %p235, %p236
      %p238 = scmp.ne.s32.totalorder %s227, %s228
      %p239 = scmp.eq.s32.totalorder %s25, 0
      %p240 = por %p238, %p239
      %p241 = scmp.ne.s32.totalorder %s227, %s228
      %p242 = scmp.eq.s32.totalorder %s26, 1
      %p243 = por %p241, %p242
      %p245 = scmp.ne.s32.totalorder %s228, %s244
      %p246 = scmp.eq.s32.totalorder %s26, 0
      %p247 = por %p245, %p246
      %p248 = scmp.le.s32.totalorder 1, %s20
      %p249 = scmp.lt.s32.totalorder %s20, 3
      %p250 = pnand %p248, %p249
      %p251 = pneg %p250
      // Predicated region
      $region9: #{tpu_custom_call.1} parent=5 // pred_check
        _
      $region10: #{tpu_custom_call.1} parent=5 // pred_check_branch
        %253 = sbr.rel (%p250) target = $region12
      $region11: #{tpu_custom_call.1} parent=5 // pred_region
        %s254 = ssub.s32 %s20, 1
        // Predicated region
        $region13: #{tpu_custom_call.1} parent=11 // pred_check
          %p255 = pneg %p67
        $region14: #{tpu_custom_call.1} parent=11 // pred_check_branch
          %257 = sbr.rel (%p255) target = $region16
        $region15: #{tpu_custom_call.1} parent=11 // pred_region
          %259 = vsyncadd [#allocation3], 0
          %s260 = sshll.u32 %s1, 4
          %s261 = int_to_ptr.hbm [resolvable:$true] %s260
          %s262 = sshll.u32 [#allocation2], 4
          %s263 = int_to_ptr.vmem [resolvable:$true] %s262
          %268 = dma.hbm_to_vmem [thread:$0]  %s261, 256, %s263, [#allocation3], 64, 64, 4
        $region16: #{tpu_custom_call.1} parent=11 // pred_fallthru
          _
        // Predicated region
        $region17: #{tpu_custom_call.1} parent=11 // pred_check
          %p269 = pneg %p88
        $region18: #{tpu_custom_call.1} parent=11 // pred_check_branch
          %271 = sbr.rel (%p269) target = $region20
        $region19: #{tpu_custom_call.1} parent=11 // pred_region
          _
        $region20: #{tpu_custom_call.1} parent=11 // pred_fallthru
          _
        // Predicated region
        $region21: #{tpu_custom_call.1} parent=11 // pred_check
          %p272 = pneg %p109
        $region22: #{tpu_custom_call.1} parent=11 // pred_check_branch
          %274 = sbr.rel (%p272) target = $region24
        $region23: #{tpu_custom_call.1} parent=11 // pred_region
          _
        $region24: #{tpu_custom_call.1} parent=11 // pred_fallthru
          _
        // Predicated region
        $region25: #{tpu_custom_call.1} parent=11 // pred_check
          %p275 = pneg %p130
        $region26: #{tpu_custom_call.1} parent=11 // pred_check_branch
          %277 = sbr.rel (%p275) target = $region28
        $region27: #{tpu_custom_call.1} parent=11 // pred_region
          %279 = vsyncadd [#allocation6], 0
          %s281 = sshll.u32 %s4, 4
          %s282 = int_to_ptr.hbm [resolvable:$true] %s281
          %s283 = sshll.u32 [#allocation5], 4
          %s284 = int_to_ptr.vmem [resolvable:$true] %s283
          %286 = dma.hbm_to_vmem [thread:$0]  %s282, 64, %s284, [#allocation6]
        $region28: #{tpu_custom_call.1} parent=11 // pred_fallthru
          _
        // Predicated region
        $region29: #{tpu_custom_call.1} parent=11 // pred_check
          %p287 = pneg %p151
        $region30: #{tpu_custom_call.1} parent=11 // pred_check_branch
          %289 = sbr.rel (%p287) target = $region32
        $region31: #{tpu_custom_call.1} parent=11 // pred_region
          %291 = vsyncadd [#allocation6], 0
          %s292 = sshll.u32 %s5, 4
          %s293 = int_to_ptr.hbm [resolvable:$true] %s292
          %s294 = sshll.u32 [#allocation7], 4
          %s295 = int_to_ptr.vmem [resolvable:$true] %s294
          %300 = dma.hbm_to_vmem [thread:$0]  %s293, 4096, %s295, [#allocation6], 64, 64, 4
        $region32: #{tpu_custom_call.1} parent=11 // pred_fallthru
          _
        // Predicated region
        $region33: #{tpu_custom_call.1} parent=11 // pred_check
          %p301 = pneg %p172
        $region34: #{tpu_custom_call.1} parent=11 // pred_check_branch
          %303 = sbr.rel (%p301) target = $region36
        $region35: #{tpu_custom_call.1} parent=11 // pred_region
          _
        $region36: #{tpu_custom_call.1} parent=11 // pred_fallthru
          _
        // Predicated region
        $region37: #{tpu_custom_call.1} parent=11 // pred_check
          %p304 = pneg %p193
        $region38: #{tpu_custom_call.1} parent=11 // pred_check_branch
          %306 = sbr.rel (%p304) target = $region40
        $region39: #{tpu_custom_call.1} parent=11 // pred_region
          _
        $region40: #{tpu_custom_call.1} parent=11 // pred_fallthru
          _
        // Predicated region
        $region41: #{tpu_custom_call.1} parent=11 // pred_check
          %p307 = pneg %p214
        $region42: #{tpu_custom_call.1} parent=11 // pred_check_branch
          %309 = sbr.rel (%p307) target = $region44
        $region43: #{tpu_custom_call.1} parent=11 // pred_region
          _
        $region44: #{tpu_custom_call.1} parent=11 // pred_fallthru
          _
      $region12: #{tpu_custom_call.1} parent=5 // pred_fallthru
        _
      %p310 = scmp.lt.s32.totalorder %s20, 2
      // Predicated region
      $region45: #{tpu_custom_call.1} parent=5 // pred_check
        %p311 = pneg %p310
      $region46: #{tpu_custom_call.1} parent=5 // pred_check_branch
        %313 = sbr.rel (%p311) target = $region48
      $region47: #{tpu_custom_call.1} parent=5 // pred_region
        // Predicated region
        $region49: #{tpu_custom_call.1} parent=47 // pred_check
          %p314 = pneg %p40
        $region50: #{tpu_custom_call.1} parent=47 // pred_check_branch
          %316 = sbr.rel (%p314) target = $region52
        $region51: #{tpu_custom_call.1} parent=47 // pred_region
          %s317 = smul.u32 16, %s20
          %p318 = scmp.lt.s32.totalorder %s317, 31
          %s319 = scalar_select %p318, %s317, 31
          %s320 = smul.addr %s319, 8
          %s321 = scalar_lea.vmem %s0, %s320
          %s322 = smul.u32 16, %s20
        $region52: #{tpu_custom_call.1} parent=47 // pred_fallthru
          _
      $region48: #{tpu_custom_call.1} parent=5 // pred_fallthru
        _
      %p323 = scmp.le.s32.totalorder 1, %s20
      %p324 = scmp.lt.s32.totalorder %s20, 3
      %p325 = pnand %p323, %p324
      %p326 = pneg %p325
      // Predicated region
      $region53: #{tpu_custom_call.1} parent=5 // pred_check
        _
      $region54: #{tpu_custom_call.1} parent=5 // pred_check_branch
        %328 = sbr.rel (%p325) target = $region56
      $region55: #{tpu_custom_call.1} parent=5 // pred_region
        %s329 = ssub.s32 %s20, 1
        // Predicated region
        $region57: #{tpu_custom_call.1} parent=55 // pred_check
          %p330 = pneg %p67
        $region58: #{tpu_custom_call.1} parent=55 // pred_check_branch
          %332 = sbr.rel (%p330) target = $region60
        $region59: #{tpu_custom_call.1} parent=55 // pred_region
          %334 = dma.done [#allocation3], 256
        $region60: #{tpu_custom_call.1} parent=55 // pred_fallthru
          _
        // Predicated region
        $region61: #{tpu_custom_call.1} parent=55 // pred_check
          %p335 = pneg %p130
        $region62: #{tpu_custom_call.1} parent=55 // pred_check_branch
          %337 = sbr.rel (%p335) target = $region64
        $region63: #{tpu_custom_call.1} parent=55 // pred_region
          %339 = dma.done [#allocation6], 64
        $region64: #{tpu_custom_call.1} parent=55 // pred_fallthru
          _
        // Predicated region
        $region65: #{tpu_custom_call.1} parent=55 // pred_check
          %p340 = pneg %p151
        $region66: #{tpu_custom_call.1} parent=55 // pred_check_branch
          %342 = sbr.rel (%p340) target = $region68
        $region67: #{tpu_custom_call.1} parent=55 // pred_region
          %344 = dma.done [#allocation6], 4096
        $region68: #{tpu_custom_call.1} parent=55 // pred_fallthru
          _
        %s345 = smul.u32 16, %s25
        %p346 = scmp.lt.s32.totalorder %s345, 31
        %s347 = scalar_select %p346, %s345, 31
        %s348 = smul.addr %s347, 8
        %s349 = scalar_lea.vmem %s0, %s348
        %p350 = pneg %p46
        %p351 = pneg %p43
        %p352 = pneg %p67
        %p353 = pneg %p64
        %p354 = pneg %p88
        %p355 = pneg %p85
        %p356 = pneg %p109
        %p357 = pneg %p106
        %p358 = pneg %p130
        %p359 = pneg %p127
        %p360 = pneg %p151
        %p361 = pneg %p148
        %p362 = pneg %p172
        %p363 = pneg %p169
        %p364 = pneg %p193
        %p365 = pneg %p190
        %p366 = pneg %p214
        %p367 = pneg %p211
        %p368 = pneg %p240
        %p369 = pneg %p237
        %s370 = sand.u32 %s227, 1
        %s371 = scalar_lea.sflag [#allocation4], %s370
        %s372 = sand.u32 %s227, 1
        %s373 = smul.addr %s372, 128
        %s374 = scalar_lea.vmem [#allocation8], %s373
        %s375 = smul.u32 16, %s25
        %p376 = scmp.lt.s32.totalorder %s375, 31
        %s377 = scalar_select %p376, %s375, 31
        %s378 = smul.addr %s377, 8
        %s379 = scalar_lea.vmem %s0, %s378
        %s380 = smul.u32 16, %s25
        %s381 = smul.u32 16, %s25
        %v383 = vld [vmem:[%s379] sm:$0xff]
        %v384 = vld [vmem:[%s379 + $0x8] sm:$0xff]
        %v385 = vld [vmem:[%s379 + $0x10] sm:$0xff]
        %v386 = vld [vmem:[%s379 + $0x18] sm:$0xff]
        %v387 = vld [vmem:[%s379 + $0x20] sm:$0xff]
        %v388 = vld [vmem:[%s379 + $0x28] sm:$0xff]
        %v389 = vld [vmem:[%s379 + $0x30] sm:$0xff]
        %v390 = vld [vmem:[%s379 + $0x38] sm:$0xff]
        %v391 = vld [vmem:[%s379 + $0x40] sm:$0xff]
        %v392 = vld [vmem:[%s379 + $0x48] sm:$0xff]
        %v393 = vld [vmem:[%s379 + $0x50] sm:$0xff]
        %v394 = vld [vmem:[%s379 + $0x58] sm:$0xff]
        %v395 = vld [vmem:[%s379 + $0x60] sm:$0xff]
        %v396 = vld [vmem:[%s379 + $0x68] sm:$0xff]
        %v397 = vld [vmem:[%s379 + $0x70] sm:$0xff]
        %v398 = vld [vmem:[%s379 + $0x78] sm:$0xff]
        %v399 = vpack.c.bf16 %v384, %v383
        %v400 = vpack.c.bf16 %v386, %v385
        %v401 = vpack.c.bf16 %v388, %v387
        %v402 = vpack.c.bf16 %v390, %v389
        %v403 = vpack.c.bf16 %v392, %v391
        %v404 = vpack.c.bf16 %v394, %v393
        %v405 = vpack.c.bf16 %v396, %v395
        %v406 = vpack.c.bf16 %v398, %v397
        %v407 = vld [vmem:[#allocation2] sm:$0xf]
        %v408 = vld [vmem:[#allocation2 + $0x4] sm:$0xf]
        %v409 = vld [vmem:[#allocation2 + $0x8] sm:$0xf]
        %v410 = vld [vmem:[#allocation2 + $0xc] sm:$0xf]
        %v411 = vld [vmem:[%s2] sm:$0x1]
        %v413 = vperm.slane %v411, 0
        %v419 = vunpack.c.l.b16 %v407
        %v420 = vunpack.c.l.b16 %v408
        %v421 = vunpack.c.l.b16 %v409
        %v422 = vunpack.c.l.b16 %v410
        %v423 = vpack.c.b16 %v420, %v419
        %v424 = vpack.c.b16 %v422, %v421
        %vm427 = vcmask 261120
        %v429 = vsel %vm427, %v399, 0
        %v432 = vsel %vm427, %v400, 0
        %v435 = vsel %vm427, %v401, 0
        %v438 = vsel %vm427, %v402, 0
        %v441 = vsel %vm427, %v403, 0
        %v444 = vsel %vm427, %v404, 0
        %v447 = vsel %vm427, %v405, 0
        %v450 = vsel %vm427, %v406, 0
        %452 = vmatpush.bf16.msra.mxu0 0
        %453 = vmatpush.bf16.msra.mxu0 0
        %454 = vmatpush.bf16.msra.mxu0 0
        %455 = vmatpush.bf16.msra.mxu0 0
        %456 = vmatpush.bf16.msra.mxu0 0
        %457 = vmatpush.bf16.msra.mxu0 0
        %458 = vmatpush.bf16.msra.mxu0 %v424
        %459 = vmatpush.bf16.msra.mxu0 %v423
        %460 = vmatmul.bf16.gmra.mxu0 %v429
        %v461 = vpop.f32.mrf.mxu0
        %v462 = vadd.f32 %v413, %v461
        %v463 = vpop.f32.mrf.mxu0
        %v464 = vadd.f32 %v413, %v463
        %465 = vmatmul.bf16.gmra.mxu0 %v432
        %v466 = vpop.f32.mrf.mxu0
        %v467 = vadd.f32 %v413, %v466
        %v468 = vpop.f32.mrf.mxu0
        %v469 = vadd.f32 %v413, %v468
        %470 = vmatmul.bf16.gmra.mxu0 %v435
        %v471 = vpop.f32.mrf.mxu0
        %v472 = vadd.f32 %v413, %v471
        %v473 = vpop.f32.mrf.mxu0
        %v474 = vadd.f32 %v413, %v473
        %475 = vmatmul.bf16.gmra.mxu0 %v438
        %v476 = vpop.f32.mrf.mxu0
        %v477 = vadd.f32 %v413, %v476
        %v478 = vpop.f32.mrf.mxu0
        %v479 = vadd.f32 %v413, %v478
        %480 = vmatmul.bf16.gmra.mxu0 %v441
        %v481 = vpop.f32.mrf.mxu0
        %v482 = vadd.f32 %v413, %v481
        %v483 = vpop.f32.mrf.mxu0
        %v484 = vadd.f32 %v413, %v483
        %485 = vmatmul.bf16.gmra.mxu0 %v444
        %v486 = vpop.f32.mrf.mxu0
        %v487 = vadd.f32 %v413, %v486
        %v488 = vpop.f32.mrf.mxu0
        %v489 = vadd.f32 %v413, %v488
        %490 = vmatmul.bf16.gmra.mxu0 %v447
        %v491 = vpop.f32.mrf.mxu0
        %v492 = vadd.f32 %v413, %v491
        %v493 = vpop.f32.mrf.mxu0
        %v494 = vadd.f32 %v413, %v493
        %495 = vmatmul.bf16.gmra.mxu0 %v450
        %v496 = vpop.f32.mrf.mxu0
        %v497 = vadd.f32 %v413, %v496
        %v498 = vpop.f32.mrf.mxu0
        %v499 = vadd.f32 %v413, %v498
        %500 = vdwg.mxu0
        %v501 = vmax.f32 %v462, 0.0
        %v502 = vmax.f32 %v464, 0.0
        %v503 = vmax.f32 %v467, 0.0
        %v504 = vmax.f32 %v469, 0.0
        %v505 = vmax.f32 %v472, 0.0
        %v506 = vmax.f32 %v474, 0.0
        %v507 = vmax.f32 %v477, 0.0
        %v508 = vmax.f32 %v479, 0.0
        %v509 = vmax.f32 %v482, 0.0
        %v510 = vmax.f32 %v484, 0.0
        %v511 = vmax.f32 %v487, 0.0
        %v512 = vmax.f32 %v489, 0.0
        %v513 = vmax.f32 %v492, 0.0
        %v514 = vmax.f32 %v494, 0.0
        %v515 = vmax.f32 %v497, 0.0
        %v516 = vmax.f32 %v499, 0.0
        %v517 = vmin.f32 %v501, 6.0
        %v518 = vmin.f32 %v502, 6.0
        %v519 = vmin.f32 %v503, 6.0
        %v520 = vmin.f32 %v504, 6.0
        %v521 = vmin.f32 %v505, 6.0
        %v522 = vmin.f32 %v506, 6.0
        %v523 = vmin.f32 %v507, 6.0
        %v524 = vmin.f32 %v508, 6.0
        %v525 = vmin.f32 %v509, 6.0
        %v526 = vmin.f32 %v510, 6.0
        %v527 = vmin.f32 %v511, 6.0
        %v528 = vmin.f32 %v512, 6.0
        %v529 = vmin.f32 %v513, 6.0
        %v530 = vmin.f32 %v514, 6.0
        %v531 = vmin.f32 %v515, 6.0
        %v532 = vmin.f32 %v516, 6.0
        %v533 = vpack.c.bf16 %v518, %v517
        %v534 = vpack.c.bf16 %v520, %v519
        %v535 = vpack.c.bf16 %v522, %v521
        %v536 = vpack.c.bf16 %v524, %v523
        %v537 = vpack.c.bf16 %v526, %v525
        %v538 = vpack.c.bf16 %v528, %v527
        %v539 = vpack.c.bf16 %v530, %v529
        %v540 = vpack.c.bf16 %v532, %v531
        %v541 = vld [vmem:[%s3] sm:$0xff]
        %v542 = vld [vmem:[%s3 + $0x8] sm:$0xff]
        %v543 = vld [vmem:[%s3 + $0x10] sm:$0xff]
        %v544 = vld [vmem:[%s3 + $0x18] sm:$0xff]
        %v545 = vld [vmem:[%s3 + $0x20] sm:$0xff]
        %v546 = vld [vmem:[%s3 + $0x28] sm:$0xff]
        %v547 = vld [vmem:[%s3 + $0x30] sm:$0xff]
        %v548 = vld [vmem:[%s3 + $0x38] sm:$0xff]
        %v549 = vld [vmem:[%s3 + $0x40] sm:$0xff]
        %v550 = vld [vmem:[%s3 + $0x48] sm:$0xff]
        %v551 = vld [vmem:[%s3 + $0x50] sm:$0xff]
        %v552 = vld [vmem:[%s3 + $0x58] sm:$0xff]
        %v553 = vld [vmem:[%s3 + $0x60] sm:$0xff]
        %v554 = vld [vmem:[%s3 + $0x68] sm:$0xff]
        %v555 = vld [vmem:[%s3 + $0x70] sm:$0xff]
        %v556 = vld [vmem:[%s3 + $0x78] sm:$0xff]
        %v557 = vld [vmem:[%s3 + $0x80] sm:$0xff]
        %v558 = vld [vmem:[%s3 + $0x88] sm:$0xff]
        %v559 = vld [vmem:[%s3 + $0x90] sm:$0xff]
        %v560 = vld [vmem:[%s3 + $0x98] sm:$0xff]
        %v561 = vld [vmem:[%s3 + $0xa0] sm:$0xff]
        %v562 = vld [vmem:[%s3 + $0xa8] sm:$0xff]
        %v563 = vld [vmem:[%s3 + $0xb0] sm:$0xff]
        %v564 = vld [vmem:[%s3 + $0xb8] sm:$0xff]
        %v565 = vld [vmem:[%s3 + $0xc0] sm:$0xff]
        %v566 = vld [vmem:[%s3 + $0xc8] sm:$0xff]
        %v567 = vld [vmem:[%s3 + $0xd0] sm:$0xff]
        %v568 = vld [vmem:[%s3 + $0xd8] sm:$0xff]
        %v569 = vld [vmem:[%s3 + $0xe0] sm:$0xff]
        %v570 = vld [vmem:[%s3 + $0xe8] sm:$0xff]
        %v571 = vld [vmem:[%s3 + $0xf0] sm:$0xff]
        %v572 = vld [vmem:[%s3 + $0xf8] sm:$0xff]
        %v573 = vld [vmem:[#allocation5] sm:$0xf]
        %v575 = vperm.slane %v573, 0
        %v576 = vperm.slane %v573, 1
        %v577 = vperm.slane %v573, 2
        %v578 = vperm.slane %v573, 3
        %v615 = vunpack.c.l.b16 %v541
        %v616 = vunpack.c.h.b16 %v541
        %v617 = vunpack.c.l.b16 %v542
        %v618 = vunpack.c.h.b16 %v542
        %v619 = vunpack.c.l.b16 %v543
        %v620 = vunpack.c.h.b16 %v543
        %v621 = vunpack.c.l.b16 %v544
        %v622 = vunpack.c.h.b16 %v544
        %v623 = vunpack.c.l.b16 %v545
        %v624 = vunpack.c.h.b16 %v545
        %v625 = vunpack.c.l.b16 %v546
        %v626 = vunpack.c.h.b16 %v546
        %v627 = vunpack.c.l.b16 %v547
        %v628 = vunpack.c.h.b16 %v547
        %v629 = vunpack.c.l.b16 %v548
        %v630 = vunpack.c.h.b16 %v548
        %v631 = vunpack.c.l.b16 %v549
        %v632 = vunpack.c.h.b16 %v549
        %v633 = vunpack.c.l.b16 %v550
        %v634 = vunpack.c.h.b16 %v550
        %v635 = vunpack.c.l.b16 %v551
        %v636 = vunpack.c.h.b16 %v551
        %v637 = vunpack.c.l.b16 %v552
        %v638 = vunpack.c.h.b16 %v552
        %v639 = vunpack.c.l.b16 %v553
        %v640 = vunpack.c.h.b16 %v553
        %v641 = vunpack.c.l.b16 %v554
        %v642 = vunpack.c.h.b16 %v554
        %v643 = vunpack.c.l.b16 %v555
        %v644 = vunpack.c.h.b16 %v555
        %v645 = vunpack.c.l.b16 %v556
        %v646 = vunpack.c.h.b16 %v556
        %v647 = vunpack.c.l.b16 %v557
        %v648 = vunpack.c.h.b16 %v557
        %v649 = vunpack.c.l.b16 %v558
        %v650 = vunpack.c.h.b16 %v558
        %v651 = vunpack.c.l.b16 %v559
        %v652 = vunpack.c.h.b16 %v559
        %v653 = vunpack.c.l.b16 %v560
        %v654 = vunpack.c.h.b16 %v560
        %v655 = vunpack.c.l.b16 %v561
        %v656 = vunpack.c.h.b16 %v561
        %v657 = vunpack.c.l.b16 %v562
        %v658 = vunpack.c.h.b16 %v562
        %v659 = vunpack.c.l.b16 %v563
        %v660 = vunpack.c.h.b16 %v563
        %v661 = vunpack.c.l.b16 %v564
        %v662 = vunpack.c.h.b16 %v564
        %v663 = vunpack.c.l.b16 %v565
        %v664 = vunpack.c.h.b16 %v565
        %v665 = vunpack.c.l.b16 %v566
        %v666 = vunpack.c.h.b16 %v566
        %v667 = vunpack.c.l.b16 %v567
        %v668 = vunpack.c.h.b16 %v567
        %v669 = vunpack.c.l.b16 %v568
        %v670 = vunpack.c.h.b16 %v568
        %v671 = vunpack.c.l.b16 %v569
        %v672 = vunpack.c.h.b16 %v569
        %v673 = vunpack.c.l.b16 %v570
        %v674 = vunpack.c.h.b16 %v570
        %v675 = vunpack.c.l.b16 %v571
        %v676 = vunpack.c.h.b16 %v571
        %v677 = vunpack.c.l.b16 %v572
        %v678 = vunpack.c.h.b16 %v572
        %v679 = vpack.c.b16 %v619, %v615
        %v680 = vpack.c.b16 %v620, %v616
        %v681 = vpack.c.b16 %v621, %v617
        %v682 = vpack.c.b16 %v622, %v618
        %v683 = vpack.c.b16 %v627, %v623
        %v684 = vpack.c.b16 %v628, %v624
        %v685 = vpack.c.b16 %v629, %v625
        %v686 = vpack.c.b16 %v630, %v626
        %v687 = vpack.c.b16 %v635, %v631
        %v688 = vpack.c.b16 %v636, %v632
        %v689 = vpack.c.b16 %v637, %v633
        %v690 = vpack.c.b16 %v638, %v634
        %v691 = vpack.c.b16 %v643, %v639
        %v692 = vpack.c.b16 %v644, %v640
        %v693 = vpack.c.b16 %v645, %v641
        %v694 = vpack.c.b16 %v646, %v642
        %v695 = vpack.c.b16 %v651, %v647
        %v696 = vpack.c.b16 %v652, %v648
        %v697 = vpack.c.b16 %v653, %v649
        %v698 = vpack.c.b16 %v654, %v650
        %v699 = vpack.c.b16 %v659, %v655
        %v700 = vpack.c.b16 %v660, %v656
        %v701 = vpack.c.b16 %v661, %v657
        %v702 = vpack.c.b16 %v662, %v658
        %v703 = vpack.c.b16 %v667, %v663
        %v704 = vpack.c.b16 %v668, %v664
        %v705 = vpack.c.b16 %v669, %v665
        %v706 = vpack.c.b16 %v670, %v666
        %v707 = vpack.c.b16 %v675, %v671
        %v708 = vpack.c.b16 %v676, %v672
        %v709 = vpack.c.b16 %v677, %v673
        %v710 = vpack.c.b16 %v678, %v674
        %743 = vmatpush.bf16.msra.mxu0 %v707
        %744 = vmatpush.bf16.msra.mxu0 %v703
        %745 = vmatpush.bf16.msra.mxu0 %v699
        %746 = vmatpush.bf16.msra.mxu0 %v695
        %747 = vmatpush.bf16.msra.mxu0 %v691
        %748 = vmatpush.bf16.msra.mxu0 %v687
        %749 = vmatpush.bf16.msra.mxu0 %v683
        %750 = vmatpush.bf16.msra.mxu0 %v679
        %751 = vmatmul.bf16.gmra.mxu0 %v533
        %v752 = vpop.f32.mrf.mxu0
        %v753 = vadd.f32 %v575, %v752
        %v754 = vpop.f32.mrf.mxu0
        %v755 = vadd.f32 %v575, %v754
        %756 = vmatmul.bf16.gmra.mxu0 %v534
        %v757 = vpop.f32.mrf.mxu0
        %v758 = vadd.f32 %v575, %v757
        %v759 = vpop.f32.mrf.mxu0
        %v760 = vadd.f32 %v575, %v759
        %761 = vmatmul.bf16.gmra.mxu0 %v535
        %v762 = vpop.f32.mrf.mxu0
        %v763 = vadd.f32 %v575, %v762
        %v764 = vpop.f32.mrf.mxu0
        %v765 = vadd.f32 %v575, %v764
        %766 = vmatmul.bf16.gmra.mxu0 %v536
        %v767 = vpop.f32.mrf.mxu0
        %v768 = vadd.f32 %v575, %v767
        %v769 = vpop.f32.mrf.mxu0
        %v770 = vadd.f32 %v575, %v769
        %771 = vmatmul.bf16.gmra.mxu0 %v537
        %v772 = vpop.f32.mrf.mxu0
        %v773 = vadd.f32 %v575, %v772
        %v774 = vpop.f32.mrf.mxu0
        %v775 = vadd.f32 %v575, %v774
        %776 = vmatmul.bf16.gmra.mxu0 %v538
        %v777 = vpop.f32.mrf.mxu0
        %v778 = vadd.f32 %v575, %v777
        %v779 = vpop.f32.mrf.mxu0
        %v780 = vadd.f32 %v575, %v779
        %781 = vmatmul.bf16.gmra.mxu0 %v539
        %v782 = vpop.f32.mrf.mxu0
        %v783 = vadd.f32 %v575, %v782
        %v784 = vpop.f32.mrf.mxu0
        %v785 = vadd.f32 %v575, %v784
        %786 = vmatmul.bf16.gmra.mxu0 %v540
        %v787 = vpop.f32.mrf.mxu0
        %v788 = vadd.f32 %v575, %v787
        %v789 = vpop.f32.mrf.mxu0
        %v790 = vadd.f32 %v575, %v789
        %791 = vdwg.mxu0
        %792 = vmatpush.bf16.msra.mxu0 %v708
        %793 = vmatpush.bf16.msra.mxu0 %v704
        %794 = vmatpush.bf16.msra.mxu0 %v700
        %795 = vmatpush.bf16.msra.mxu0 %v696
        %796 = vmatpush.bf16.msra.mxu0 %v692
        %797 = vmatpush.bf16.msra.mxu0 %v688
        %798 = vmatpush.bf16.msra.mxu0 %v684
        %799 = vmatpush.bf16.msra.mxu0 %v680
        %800 = vmatmul.bf16.gmra.mxu0 %v533
        %v801 = vpop.f32.mrf.mxu0
        %v802 = vadd.f32 %v576, %v801
        %v803 = vpop.f32.mrf.mxu0
        %v804 = vadd.f32 %v576, %v803
        %805 = vmatmul.bf16.gmra.mxu0 %v534
        %v806 = vpop.f32.mrf.mxu0
        %v807 = vadd.f32 %v576, %v806
        %v808 = vpop.f32.mrf.mxu0
        %v809 = vadd.f32 %v576, %v808
        %810 = vmatmul.bf16.gmra.mxu0 %v535
        %v811 = vpop.f32.mrf.mxu0
        %v812 = vadd.f32 %v576, %v811
        %v813 = vpop.f32.mrf.mxu0
        %v814 = vadd.f32 %v576, %v813
        %815 = vmatmul.bf16.gmra.mxu0 %v536
        %v816 = vpop.f32.mrf.mxu0
        %v817 = vadd.f32 %v576, %v816
        %v818 = vpop.f32.mrf.mxu0
        %v819 = vadd.f32 %v576, %v818
        %820 = vmatmul.bf16.gmra.mxu0 %v537
        %v821 = vpop.f32.mrf.mxu0
        %v822 = vadd.f32 %v576, %v821
        %v823 = vpop.f32.mrf.mxu0
        %v824 = vadd.f32 %v576, %v823
        %825 = vmatmul.bf16.gmra.mxu0 %v538
        %v826 = vpop.f32.mrf.mxu0
        %v827 = vadd.f32 %v576, %v826
        %v828 = vpop.f32.mrf.mxu0
        %v829 = vadd.f32 %v576, %v828
        %830 = vmatmul.bf16.gmra.mxu0 %v539
        %v831 = vpop.f32.mrf.mxu0
        %v832 = vadd.f32 %v576, %v831
        %v833 = vpop.f32.mrf.mxu0
        %v834 = vadd.f32 %v576, %v833
        %835 = vmatmul.bf16.gmra.mxu0 %v540
        %v836 = vpop.f32.mrf.mxu0
        %v837 = vadd.f32 %v576, %v836
        %v838 = vpop.f32.mrf.mxu0
        %v839 = vadd.f32 %v576, %v838
        %840 = vdwg.mxu0
        %841 = vmatpush.bf16.msra.mxu0 %v709
        %842 = vmatpush.bf16.msra.mxu0 %v705
        %843 = vmatpush.bf16.msra.mxu0 %v701
        %844 = vmatpush.bf16.msra.mxu0 %v697
        %845 = vmatpush.bf16.msra.mxu0 %v693
        %846 = vmatpush.bf16.msra.mxu0 %v689
        %847 = vmatpush.bf16.msra.mxu0 %v685
        %848 = vmatpush.bf16.msra.mxu0 %v681
        %849 = vmatmul.bf16.gmra.mxu0 %v533
        %v850 = vpop.f32.mrf.mxu0
        %v851 = vadd.f32 %v577, %v850
        %v852 = vpop.f32.mrf.mxu0
        %v853 = vadd.f32 %v577, %v852
        %854 = vmatmul.bf16.gmra.mxu0 %v534
        %v855 = vpop.f32.mrf.mxu0
        %v856 = vadd.f32 %v577, %v855
        %v857 = vpop.f32.mrf.mxu0
        %v858 = vadd.f32 %v577, %v857
        %859 = vmatmul.bf16.gmra.mxu0 %v535
        %v860 = vpop.f32.mrf.mxu0
        %v861 = vadd.f32 %v577, %v860
        %v862 = vpop.f32.mrf.mxu0
        %v863 = vadd.f32 %v577, %v862
        %864 = vmatmul.bf16.gmra.mxu0 %v536
        %v865 = vpop.f32.mrf.mxu0
        %v866 = vadd.f32 %v577, %v865
        %v867 = vpop.f32.mrf.mxu0
        %v868 = vadd.f32 %v577, %v867
        %869 = vmatmul.bf16.gmra.mxu0 %v537
        %v870 = vpop.f32.mrf.mxu0
        %v871 = vadd.f32 %v577, %v870
        %v872 = vpop.f32.mrf.mxu0
        %v873 = vadd.f32 %v577, %v872
        %874 = vmatmul.bf16.gmra.mxu0 %v538
        %v875 = vpop.f32.mrf.mxu0
        %v876 = vadd.f32 %v577, %v875
        %v877 = vpop.f32.mrf.mxu0
        %v878 = vadd.f32 %v577, %v877
        %879 = vmatmul.bf16.gmra.mxu0 %v539
        %v880 = vpop.f32.mrf.mxu0
        %v881 = vadd.f32 %v577, %v880
        %v882 = vpop.f32.mrf.mxu0
        %v883 = vadd.f32 %v577, %v882
        %884 = vmatmul.bf16.gmra.mxu0 %v540
        %v885 = vpop.f32.mrf.mxu0
        %v886 = vadd.f32 %v577, %v885
        %v887 = vpop.f32.mrf.mxu0
        %v888 = vadd.f32 %v577, %v887
        %889 = vdwg.mxu0
        %890 = vmatpush.bf16.msra.mxu0 %v710
        %891 = vmatpush.bf16.msra.mxu0 %v706
        %892 = vmatpush.bf16.msra.mxu0 %v702
        %893 = vmatpush.bf16.msra.mxu0 %v698
        %894 = vmatpush.bf16.msra.mxu0 %v694
        %895 = vmatpush.bf16.msra.mxu0 %v690
        %896 = vmatpush.bf16.msra.mxu0 %v686
        %897 = vmatpush.bf16.msra.mxu0 %v682
        %898 = vmatmul.bf16.gmra.mxu0 %v533
        %v899 = vpop.f32.mrf.mxu0
        %v900 = vadd.f32 %v578, %v899
        %v901 = vpop.f32.mrf.mxu0
        %v902 = vadd.f32 %v578, %v901
        %903 = vmatmul.bf16.gmra.mxu0 %v534
        %v904 = vpop.f32.mrf.mxu0
        %v905 = vadd.f32 %v578, %v904
        %v906 = vpop.f32.mrf.mxu0
        %v907 = vadd.f32 %v578, %v906
        %908 = vmatmul.bf16.gmra.mxu0 %v535
        %v909 = vpop.f32.mrf.mxu0
        %v910 = vadd.f32 %v578, %v909
        %v911 = vpop.f32.mrf.mxu0
        %v912 = vadd.f32 %v578, %v911
        %913 = vmatmul.bf16.gmra.mxu0 %v536
        %v914 = vpop.f32.mrf.mxu0
        %v915 = vadd.f32 %v578, %v914
        %v916 = vpop.f32.mrf.mxu0
        %v917 = vadd.f32 %v578, %v916
        %918 = vmatmul.bf16.gmra.mxu0 %v537
        %v919 = vpop.f32.mrf.mxu0
        %v920 = vadd.f32 %v578, %v919
        %v921 = vpop.f32.mrf.mxu0
        %v922 = vadd.f32 %v578, %v921
        %923 = vmatmul.bf16.gmra.mxu0 %v538
        %v924 = vpop.f32.mrf.mxu0
        %v925 = vadd.f32 %v578, %v924
        %v926 = vpop.f32.mrf.mxu0
        %v927 = vadd.f32 %v578, %v926
        %928 = vmatmul.bf16.gmra.mxu0 %v539
        %v929 = vpop.f32.mrf.mxu0
        %v930 = vadd.f32 %v578, %v929
        %v931 = vpop.f32.mrf.mxu0
        %v932 = vadd.f32 %v578, %v931
        %933 = vmatmul.bf16.gmra.mxu0 %v540
        %v934 = vpop.f32.mrf.mxu0
        %v935 = vadd.f32 %v578, %v934
        %v936 = vpop.f32.mrf.mxu0
        %v937 = vadd.f32 %v578, %v936
        %938 = vdwg.mxu0
        %v939 = vmax.f32 %v753, 0.0
        %v940 = vmax.f32 %v802, 0.0
        %v941 = vmax.f32 %v851, 0.0
        %v942 = vmax.f32 %v900, 0.0
        %v943 = vmax.f32 %v755, 0.0
        %v944 = vmax.f32 %v804, 0.0
        %v945 = vmax.f32 %v853, 0.0
        %v946 = vmax.f32 %v902, 0.0
        %v947 = vmax.f32 %v758, 0.0
        %v948 = vmax.f32 %v807, 0.0
        %v949 = vmax.f32 %v856, 0.0
        %v950 = vmax.f32 %v905, 0.0
        %v951 = vmax.f32 %v760, 0.0
        %v952 = vmax.f32 %v809, 0.0
        %v953 = vmax.f32 %v858, 0.0
        %v954 = vmax.f32 %v907, 0.0
        %v955 = vmax.f32 %v763, 0.0
        %v956 = vmax.f32 %v812, 0.0
        %v957 = vmax.f32 %v861, 0.0
        %v958 = vmax.f32 %v910, 0.0
        %v959 = vmax.f32 %v765, 0.0
        %v960 = vmax.f32 %v814, 0.0
        %v961 = vmax.f32 %v863, 0.0
        %v962 = vmax.f32 %v912, 0.0
        %v963 = vmax.f32 %v768, 0.0
        %v964 = vmax.f32 %v817, 0.0
        %v965 = vmax.f32 %v866, 0.0
        %v966 = vmax.f32 %v915, 0.0
        %v967 = vmax.f32 %v770, 0.0
        %v968 = vmax.f32 %v819, 0.0
        %v969 = vmax.f32 %v868, 0.0
        %v970 = vmax.f32 %v917, 0.0
        %v971 = vmax.f32 %v773, 0.0
        %v972 = vmax.f32 %v822, 0.0
        %v973 = vmax.f32 %v871, 0.0
        %v974 = vmax.f32 %v920, 0.0
        %v975 = vmax.f32 %v775, 0.0
        %v976 = vmax.f32 %v824, 0.0
        %v977 = vmax.f32 %v873, 0.0
        %v978 = vmax.f32 %v922, 0.0
        %v979 = vmax.f32 %v778, 0.0
        %v980 = vmax.f32 %v827, 0.0
        %v981 = vmax.f32 %v876, 0.0
        %v982 = vmax.f32 %v925, 0.0
        %v983 = vmax.f32 %v780, 0.0
        %v984 = vmax.f32 %v829, 0.0
        %v985 = vmax.f32 %v878, 0.0
        %v986 = vmax.f32 %v927, 0.0
        %v987 = vmax.f32 %v783, 0.0
        %v988 = vmax.f32 %v832, 0.0
        %v989 = vmax.f32 %v881, 0.0
        %v990 = vmax.f32 %v930, 0.0
        %v991 = vmax.f32 %v785, 0.0
        %v992 = vmax.f32 %v834, 0.0
        %v993 = vmax.f32 %v883, 0.0
        %v994 = vmax.f32 %v932, 0.0
        %v995 = vmax.f32 %v788, 0.0
        %v996 = vmax.f32 %v837, 0.0
        %v997 = vmax.f32 %v886, 0.0
        %v998 = vmax.f32 %v935, 0.0
        %v999 = vmax.f32 %v790, 0.0
        %v1000 = vmax.f32 %v839, 0.0
        %v1001 = vmax.f32 %v888, 0.0
        %v1002 = vmax.f32 %v937, 0.0
        %v1003 = vmin.f32 %v939, 6.0
        %v1004 = vmin.f32 %v940, 6.0
        %v1005 = vmin.f32 %v941, 6.0
        %v1006 = vmin.f32 %v942, 6.0
        %v1007 = vmin.f32 %v943, 6.0
        %v1008 = vmin.f32 %v944, 6.0
        %v1009 = vmin.f32 %v945, 6.0
        %v1010 = vmin.f32 %v946, 6.0
        %v1011 = vmin.f32 %v947, 6.0
        %v1012 = vmin.f32 %v948, 6.0
        %v1013 = vmin.f32 %v949, 6.0
        %v1014 = vmin.f32 %v950, 6.0
        %v1015 = vmin.f32 %v951, 6.0
        %v1016 = vmin.f32 %v952, 6.0
        %v1017 = vmin.f32 %v953, 6.0
        %v1018 = vmin.f32 %v954, 6.0
        %v1019 = vmin.f32 %v955, 6.0
        %v1020 = vmin.f32 %v956, 6.0
        %v1021 = vmin.f32 %v957, 6.0
        %v1022 = vmin.f32 %v958, 6.0
        %v1023 = vmin.f32 %v959, 6.0
        %v1024 = vmin.f32 %v960, 6.0
        %v1025 = vmin.f32 %v961, 6.0
        %v1026 = vmin.f32 %v962, 6.0
        %v1027 = vmin.f32 %v963, 6.0
        %v1028 = vmin.f32 %v964, 6.0
        %v1029 = vmin.f32 %v965, 6.0
        %v1030 = vmin.f32 %v966, 6.0
        %v1031 = vmin.f32 %v967, 6.0
        %v1032 = vmin.f32 %v968, 6.0
        %v1033 = vmin.f32 %v969, 6.0
        %v1034 = vmin.f32 %v970, 6.0
        %v1035 = vmin.f32 %v971, 6.0
        %v1036 = vmin.f32 %v972, 6.0
        %v1037 = vmin.f32 %v973, 6.0
        %v1038 = vmin.f32 %v974, 6.0
        %v1039 = vmin.f32 %v975, 6.0
        %v1040 = vmin.f32 %v976, 6.0
        %v1041 = vmin.f32 %v977, 6.0
        %v1042 = vmin.f32 %v978, 6.0
        %v1043 = vmin.f32 %v979, 6.0
        %v1044 = vmin.f32 %v980, 6.0
        %v1045 = vmin.f32 %v981, 6.0
        %v1046 = vmin.f32 %v982, 6.0
        %v1047 = vmin.f32 %v983, 6.0
        %v1048 = vmin.f32 %v984, 6.0
        %v1049 = vmin.f32 %v985, 6.0
        %v1050 = vmin.f32 %v986, 6.0
        %v1051 = vmin.f32 %v987, 6.0
        %v1052 = vmin.f32 %v988, 6.0
        %v1053 = vmin.f32 %v989, 6.0
        %v1054 = vmin.f32 %v990, 6.0
        %v1055 = vmin.f32 %v991, 6.0
        %v1056 = vmin.f32 %v992, 6.0
        %v1057 = vmin.f32 %v993, 6.0
        %v1058 = vmin.f32 %v994, 6.0
        %v1059 = vmin.f32 %v995, 6.0
        %v1060 = vmin.f32 %v996, 6.0
        %v1061 = vmin.f32 %v997, 6.0
        %v1062 = vmin.f32 %v998, 6.0
        %v1063 = vmin.f32 %v999, 6.0
        %v1064 = vmin.f32 %v1000, 6.0
        %v1065 = vmin.f32 %v1001, 6.0
        %v1066 = vmin.f32 %v1002, 6.0
        %v1067 = vpack.c.bf16 %v1007, %v1003
        %v1068 = vpack.c.bf16 %v1008, %v1004
        %v1069 = vpack.c.bf16 %v1009, %v1005
        %v1070 = vpack.c.bf16 %v1010, %v1006
        %v1071 = vpack.c.bf16 %v1015, %v1011
        %v1072 = vpack.c.bf16 %v1016, %v1012
        %v1073 = vpack.c.bf16 %v1017, %v1013
        %v1074 = vpack.c.bf16 %v1018, %v1014
        %v1075 = vpack.c.bf16 %v1023, %v1019
        %v1076 = vpack.c.bf16 %v1024, %v1020
        %v1077 = vpack.c.bf16 %v1025, %v1021
        %v1078 = vpack.c.bf16 %v1026, %v1022
        %v1079 = vpack.c.bf16 %v1031, %v1027
        %v1080 = vpack.c.bf16 %v1032, %v1028
        %v1081 = vpack.c.bf16 %v1033, %v1029
        %v1082 = vpack.c.bf16 %v1034, %v1030
        %v1083 = vpack.c.bf16 %v1039, %v1035
        %v1084 = vpack.c.bf16 %v1040, %v1036
        %v1085 = vpack.c.bf16 %v1041, %v1037
        %v1086 = vpack.c.bf16 %v1042, %v1038
        %v1087 = vpack.c.bf16 %v1047, %v1043
        %v1088 = vpack.c.bf16 %v1048, %v1044
        %v1089 = vpack.c.bf16 %v1049, %v1045
        %v1090 = vpack.c.bf16 %v1050, %v1046
        %v1091 = vpack.c.bf16 %v1055, %v1051
        %v1092 = vpack.c.bf16 %v1056, %v1052
        %v1093 = vpack.c.bf16 %v1057, %v1053
        %v1094 = vpack.c.bf16 %v1058, %v1054
        %v1095 = vpack.c.bf16 %v1063, %v1059
        %v1096 = vpack.c.bf16 %v1064, %v1060
        %v1097 = vpack.c.bf16 %v1065, %v1061
        %v1098 = vpack.c.bf16 %v1066, %v1062
        %v1099 = vld [vmem:[#allocation7] sm:$0xf]
        %v1100 = vld [vmem:[#allocation7 + $0x4] sm:$0xf]
        %v1101 = vld [vmem:[#allocation7 + $0x8] sm:$0xf]
        %v1102 = vld [vmem:[#allocation7 + $0xc] sm:$0xf]
        %v1103 = vld [vmem:[#allocation7 + $0x10] sm:$0xf]
        %v1104 = vld [vmem:[#allocation7 + $0x14] sm:$0xf]
        %v1105 = vld [vmem:[#allocation7 + $0x18] sm:$0xf]
        %v1106 = vld [vmem:[#allocation7 + $0x1c] sm:$0xf]
        %v1107 = vld [vmem:[#allocation7 + $0x20] sm:$0xf]
        %v1108 = vld [vmem:[#allocation7 + $0x24] sm:$0xf]
        %v1109 = vld [vmem:[#allocation7 + $0x28] sm:$0xf]
        %v1110 = vld [vmem:[#allocation7 + $0x2c] sm:$0xf]
        %v1111 = vld [vmem:[#allocation7 + $0x30] sm:$0xf]
        %v1112 = vld [vmem:[#allocation7 + $0x34] sm:$0xf]
        %v1113 = vld [vmem:[#allocation7 + $0x38] sm:$0xf]
        %v1114 = vld [vmem:[#allocation7 + $0x3c] sm:$0xf]
        %v1115 = vld [vmem:[#allocation7 + $0x40] sm:$0xf]
        %v1116 = vld [vmem:[#allocation7 + $0x44] sm:$0xf]
        %v1117 = vld [vmem:[#allocation7 + $0x48] sm:$0xf]
        %v1118 = vld [vmem:[#allocation7 + $0x4c] sm:$0xf]
        %v1119 = vld [vmem:[#allocation7 + $0x50] sm:$0xf]
        %v1120 = vld [vmem:[#allocation7 + $0x54] sm:$0xf]
        %v1121 = vld [vmem:[#allocation7 + $0x58] sm:$0xf]
        %v1122 = vld [vmem:[#allocation7 + $0x5c] sm:$0xf]
        %v1123 = vld [vmem:[#allocation7 + $0x60] sm:$0xf]
        %v1124 = vld [vmem:[#allocation7 + $0x64] sm:$0xf]
        %v1125 = vld [vmem:[#allocation7 + $0x68] sm:$0xf]
        %v1126 = vld [vmem:[#allocation7 + $0x6c] sm:$0xf]
        %v1127 = vld [vmem:[#allocation7 + $0x70] sm:$0xf]
        %v1128 = vld [vmem:[#allocation7 + $0x74] sm:$0xf]
        %v1129 = vld [vmem:[#allocation7 + $0x78] sm:$0xf]
        %v1130 = vld [vmem:[#allocation7 + $0x7c] sm:$0xf]
        %v1131 = vld [vmem:[#allocation7 + $0x80] sm:$0xf]
        %v1132 = vld [vmem:[#allocation7 + $0x84] sm:$0xf]
        %v1133 = vld [vmem:[#allocation7 + $0x88] sm:$0xf]
        %v1134 = vld [vmem:[#allocation7 + $0x8c] sm:$0xf]
        %v1135 = vld [vmem:[#allocation7 + $0x90] sm:$0xf]
        %v1136 = vld [vmem:[#allocation7 + $0x94] sm:$0xf]
        %v1137 = vld [vmem:[#allocation7 + $0x98] sm:$0xf]
        %v1138 = vld [vmem:[#allocation7 + $0x9c] sm:$0xf]
        %v1139 = vld [vmem:[#allocation7 + $0xa0] sm:$0xf]
        %v1140 = vld [vmem:[#allocation7 + $0xa4] sm:$0xf]
        %v1141 = vld [vmem:[#allocation7 + $0xa8] sm:$0xf]
        %v1142 = vld [vmem:[#allocation7 + $0xac] sm:$0xf]
        %v1143 = vld [vmem:[#allocation7 + $0xb0] sm:$0xf]
        %v1144 = vld [vmem:[#allocation7 + $0xb4] sm:$0xf]
        %v1145 = vld [vmem:[#allocation7 + $0xb8] sm:$0xf]
        %v1146 = vld [vmem:[#allocation7 + $0xbc] sm:$0xf]
        %v1147 = vld [vmem:[#allocation7 + $0xc0] sm:$0xf]
        %v1148 = vld [vmem:[#allocation7 + $0xc4] sm:$0xf]
        %v1149 = vld [vmem:[#allocation7 + $0xc8] sm:$0xf]
        %v1150 = vld [vmem:[#allocation7 + $0xcc] sm:$0xf]
        %v1151 = vld [vmem:[#allocation7 + $0xd0] sm:$0xf]
        %v1152 = vld [vmem:[#allocation7 + $0xd4] sm:$0xf]
        %v1153 = vld [vmem:[#allocation7 + $0xd8] sm:$0xf]
        %v1154 = vld [vmem:[#allocation7 + $0xdc] sm:$0xf]
        %v1155 = vld [vmem:[#allocation7 + $0xe0] sm:$0xf]
        %v1156 = vld [vmem:[#allocation7 + $0xe4] sm:$0xf]
        %v1157 = vld [vmem:[#allocation7 + $0xe8] sm:$0xf]
        %v1158 = vld [vmem:[#allocation7 + $0xec] sm:$0xf]
        %v1159 = vld [vmem:[#allocation7 + $0xf0] sm:$0xf]
        %v1160 = vld [vmem:[#allocation7 + $0xf4] sm:$0xf]
        %v1161 = vld [vmem:[#allocation7 + $0xf8] sm:$0xf]
        %v1162 = vld [vmem:[#allocation7 + $0xfc] sm:$0xf]
        %v1163 = vld [vmem:[%s6] sm:$0x1]
        %v1165 = vperm.slane %v1163, 0
        %v1231 = vunpack.c.l.b16 %v1099
        %v1232 = vunpack.c.l.b16 %v1100
        %v1233 = vunpack.c.l.b16 %v1101
        %v1234 = vunpack.c.l.b16 %v1102
        %v1235 = vunpack.c.l.b16 %v1103
        %v1236 = vunpack.c.l.b16 %v1104
        %v1237 = vunpack.c.l.b16 %v1105
        %v1238 = vunpack.c.l.b16 %v1106
        %v1239 = vunpack.c.l.b16 %v1107
        %v1240 = vunpack.c.l.b16 %v1108
        %v1241 = vunpack.c.l.b16 %v1109
        %v1242 = vunpack.c.l.b16 %v1110
        %v1243 = vunpack.c.l.b16 %v1111
        %v1244 = vunpack.c.l.b16 %v1112
        %v1245 = vunpack.c.l.b16 %v1113
        %v1246 = vunpack.c.l.b16 %v1114
        %v1247 = vunpack.c.l.b16 %v1115
        %v1248 = vunpack.c.l.b16 %v1116
        %v1249 = vunpack.c.l.b16 %v1117
        %v1250 = vunpack.c.l.b16 %v1118
        %v1251 = vunpack.c.l.b16 %v1119
        %v1252 = vunpack.c.l.b16 %v1120
        %v1253 = vunpack.c.l.b16 %v1121
        %v1254 = vunpack.c.l.b16 %v1122
        %v1255 = vunpack.c.l.b16 %v1123
        %v1256 = vunpack.c.l.b16 %v1124
        %v1257 = vunpack.c.l.b16 %v1125
        %v1258 = vunpack.c.l.b16 %v1126
        %v1259 = vunpack.c.l.b16 %v1127
        %v1260 = vunpack.c.l.b16 %v1128
        %v1261 = vunpack.c.l.b16 %v1129
        %v1262 = vunpack.c.l.b16 %v1130
        %v1263 = vunpack.c.l.b16 %v1131
        %v1264 = vunpack.c.l.b16 %v1132
        %v1265 = vunpack.c.l.b16 %v1133
        %v1266 = vunpack.c.l.b16 %v1134
        %v1267 = vunpack.c.l.b16 %v1135
        %v1268 = vunpack.c.l.b16 %v1136
        %v1269 = vunpack.c.l.b16 %v1137
        %v1270 = vunpack.c.l.b16 %v1138
        %v1271 = vunpack.c.l.b16 %v1139
        %v1272 = vunpack.c.l.b16 %v1140
        %v1273 = vunpack.c.l.b16 %v1141
        %v1274 = vunpack.c.l.b16 %v1142
        %v1275 = vunpack.c.l.b16 %v1143
        %v1276 = vunpack.c.l.b16 %v1144
        %v1277 = vunpack.c.l.b16 %v1145
        %v1278 = vunpack.c.l.b16 %v1146
        %v1279 = vunpack.c.l.b16 %v1147
        %v1280 = vunpack.c.l.b16 %v1148
        %v1281 = vunpack.c.l.b16 %v1149
        %v1282 = vunpack.c.l.b16 %v1150
        %v1283 = vunpack.c.l.b16 %v1151
        %v1284 = vunpack.c.l.b16 %v1152
        %v1285 = vunpack.c.l.b16 %v1153
        %v1286 = vunpack.c.l.b16 %v1154
        %v1287 = vunpack.c.l.b16 %v1155
        %v1288 = vunpack.c.l.b16 %v1156
        %v1289 = vunpack.c.l.b16 %v1157
        %v1290 = vunpack.c.l.b16 %v1158
        %v1291 = vunpack.c.l.b16 %v1159
        %v1292 = vunpack.c.l.b16 %v1160
        %v1293 = vunpack.c.l.b16 %v1161
        %v1294 = vunpack.c.l.b16 %v1162
        %v1295 = vpack.c.b16 %v1232, %v1231
        %v1296 = vpack.c.b16 %v1234, %v1233
        %v1297 = vpack.c.b16 %v1236, %v1235
        %v1298 = vpack.c.b16 %v1238, %v1237
        %v1299 = vpack.c.b16 %v1240, %v1239
        %v1300 = vpack.c.b16 %v1242, %v1241
        %v1301 = vpack.c.b16 %v1244, %v1243
        %v1302 = vpack.c.b16 %v1246, %v1245
        %v1303 = vpack.c.b16 %v1248, %v1247
        %v1304 = vpack.c.b16 %v1250, %v1249
        %v1305 = vpack.c.b16 %v1252, %v1251
        %v1306 = vpack.c.b16 %v1254, %v1253
        %v1307 = vpack.c.b16 %v1256, %v1255
        %v1308 = vpack.c.b16 %v1258, %v1257
        %v1309 = vpack.c.b16 %v1260, %v1259
        %v1310 = vpack.c.b16 %v1262, %v1261
        %v1311 = vpack.c.b16 %v1264, %v1263
        %v1312 = vpack.c.b16 %v1266, %v1265
        %v1313 = vpack.c.b16 %v1268, %v1267
        %v1314 = vpack.c.b16 %v1270, %v1269
        %v1315 = vpack.c.b16 %v1272, %v1271
        %v1316 = vpack.c.b16 %v1274, %v1273
        %v1317 = vpack.c.b16 %v1276, %v1275
        %v1318 = vpack.c.b16 %v1278, %v1277
        %v1319 = vpack.c.b16 %v1280, %v1279
        %v1320 = vpack.c.b16 %v1282, %v1281
        %v1321 = vpack.c.b16 %v1284, %v1283
        %v1322 = vpack.c.b16 %v1286, %v1285
        %v1323 = vpack.c.b16 %v1288, %v1287
        %v1324 = vpack.c.b16 %v1290, %v1289
        %v1325 = vpack.c.b16 %v1292, %v1291
        %v1326 = vpack.c.b16 %v1294, %v1293
        %1359 = vmatpush.bf16.msra.mxu0 %v1302
        %1360 = vmatpush.bf16.msra.mxu0 %v1301
        %1361 = vmatpush.bf16.msra.mxu0 %v1300
        %1362 = vmatpush.bf16.msra.mxu0 %v1299
        %1363 = vmatpush.bf16.msra.mxu0 %v1298
        %1364 = vmatpush.bf16.msra.mxu0 %v1297
        %1365 = vmatpush.bf16.msra.mxu0 %v1296
        %1366 = vmatpush.bf16.msra.mxu0 %v1295
        %1367 = vmatmul.bf16.gmra.mxu0 %v1067
        %v1368 = vpop.f32.mrf.mxu0
        %v1369 = vadd.f32 %v1165, %v1368
        %v1370 = vpop.f32.mrf.mxu0
        %v1371 = vadd.f32 %v1165, %v1370
        %1372 = vmatmul.bf16.gmra.mxu0 %v1071
        %v1373 = vpop.f32.mrf.mxu0
        %v1374 = vadd.f32 %v1165, %v1373
        %v1375 = vpop.f32.mrf.mxu0
        %v1376 = vadd.f32 %v1165, %v1375
        %1377 = vmatmul.bf16.gmra.mxu0 %v1075
        %v1378 = vpop.f32.mrf.mxu0
        %v1379 = vadd.f32 %v1165, %v1378
        %v1380 = vpop.f32.mrf.mxu0
        %v1381 = vadd.f32 %v1165, %v1380
        %1382 = vmatmul.bf16.gmra.mxu0 %v1079
        %v1383 = vpop.f32.mrf.mxu0
        %v1384 = vadd.f32 %v1165, %v1383
        %v1385 = vpop.f32.mrf.mxu0
        %v1386 = vadd.f32 %v1165, %v1385
        %1387 = vmatmul.bf16.gmra.mxu0 %v1083
        %v1388 = vpop.f32.mrf.mxu0
        %v1389 = vadd.f32 %v1165, %v1388
        %v1390 = vpop.f32.mrf.mxu0
        %v1391 = vadd.f32 %v1165, %v1390
        %1392 = vmatmul.bf16.gmra.mxu0 %v1087
        %v1393 = vpop.f32.mrf.mxu0
        %v1394 = vadd.f32 %v1165, %v1393
        %v1395 = vpop.f32.mrf.mxu0
        %v1396 = vadd.f32 %v1165, %v1395
        %1397 = vmatmul.bf16.gmra.mxu0 %v1091
        %v1398 = vpop.f32.mrf.mxu0
        %v1399 = vadd.f32 %v1165, %v1398
        %v1400 = vpop.f32.mrf.mxu0
        %v1401 = vadd.f32 %v1165, %v1400
        %1402 = vmatmul.bf16.gmra.mxu0 %v1095
        %v1403 = vpop.f32.mrf.mxu0
        %v1404 = vadd.f32 %v1165, %v1403
        %v1405 = vpop.f32.mrf.mxu0
        %v1406 = vadd.f32 %v1165, %v1405
        %1407 = vdwg.mxu0
        %1408 = vmatpush.bf16.msra.mxu0 %v1310
        %1409 = vmatpush.bf16.msra.mxu0 %v1309
        %1410 = vmatpush.bf16.msra.mxu0 %v1308
        %1411 = vmatpush.bf16.msra.mxu0 %v1307
        %1412 = vmatpush.bf16.msra.mxu0 %v1306
        %1413 = vmatpush.bf16.msra.mxu0 %v1305
        %1414 = vmatpush.bf16.msra.mxu0 %v1304
        %1415 = vmatpush.bf16.msra.mxu0 %v1303
        %1416 = vmatmul.bf16.gmra.mxu0 %v1068
        %v1417 = vpop.f32.mrf.mxu0
        %v1418 = vadd.f32 %v1369, %v1417
        %v1419 = vpop.f32.mrf.mxu0
        %v1420 = vadd.f32 %v1371, %v1419
        %1421 = vmatmul.bf16.gmra.mxu0 %v1072
        %v1422 = vpop.f32.mrf.mxu0
        %v1423 = vadd.f32 %v1374, %v1422
        %v1424 = vpop.f32.mrf.mxu0
        %v1425 = vadd.f32 %v1376, %v1424
        %1426 = vmatmul.bf16.gmra.mxu0 %v1076
        %v1427 = vpop.f32.mrf.mxu0
        %v1428 = vadd.f32 %v1379, %v1427
        %v1429 = vpop.f32.mrf.mxu0
        %v1430 = vadd.f32 %v1381, %v1429
        %1431 = vmatmul.bf16.gmra.mxu0 %v1080
        %v1432 = vpop.f32.mrf.mxu0
        %v1433 = vadd.f32 %v1384, %v1432
        %v1434 = vpop.f32.mrf.mxu0
        %v1435 = vadd.f32 %v1386, %v1434
        %1436 = vmatmul.bf16.gmra.mxu0 %v1084
        %v1437 = vpop.f32.mrf.mxu0
        %v1438 = vadd.f32 %v1389, %v1437
        %v1439 = vpop.f32.mrf.mxu0
        %v1440 = vadd.f32 %v1391, %v1439
        %1441 = vmatmul.bf16.gmra.mxu0 %v1088
        %v1442 = vpop.f32.mrf.mxu0
        %v1443 = vadd.f32 %v1394, %v1442
        %v1444 = vpop.f32.mrf.mxu0
        %v1445 = vadd.f32 %v1396, %v1444
        %1446 = vmatmul.bf16.gmra.mxu0 %v1092
        %v1447 = vpop.f32.mrf.mxu0
        %v1448 = vadd.f32 %v1399, %v1447
        %v1449 = vpop.f32.mrf.mxu0
        %v1450 = vadd.f32 %v1401, %v1449
        %1451 = vmatmul.bf16.gmra.mxu0 %v1096
        %v1452 = vpop.f32.mrf.mxu0
        %v1453 = vadd.f32 %v1404, %v1452
        %v1454 = vpop.f32.mrf.mxu0
        %v1455 = vadd.f32 %v1406, %v1454
        %1456 = vdwg.mxu0
        %1457 = vmatpush.bf16.msra.mxu0 %v1318
        %1458 = vmatpush.bf16.msra.mxu0 %v1317
        %1459 = vmatpush.bf16.msra.mxu0 %v1316
        %1460 = vmatpush.bf16.msra.mxu0 %v1315
        %1461 = vmatpush.bf16.msra.mxu0 %v1314
        %1462 = vmatpush.bf16.msra.mxu0 %v1313
        %1463 = vmatpush.bf16.msra.mxu0 %v1312
        %1464 = vmatpush.bf16.msra.mxu0 %v1311
        %1465 = vmatmul.bf16.gmra.mxu0 %v1069
        %v1466 = vpop.f32.mrf.mxu0
        %v1467 = vadd.f32 %v1418, %v1466
        %v1468 = vpop.f32.mrf.mxu0
        %v1469 = vadd.f32 %v1420, %v1468
        %1470 = vmatmul.bf16.gmra.mxu0 %v1073
        %v1471 = vpop.f32.mrf.mxu0
        %v1472 = vadd.f32 %v1423, %v1471
        %v1473 = vpop.f32.mrf.mxu0
        %v1474 = vadd.f32 %v1425, %v1473
        %1475 = vmatmul.bf16.gmra.mxu0 %v1077
        %v1476 = vpop.f32.mrf.mxu0
        %v1477 = vadd.f32 %v1428, %v1476
        %v1478 = vpop.f32.mrf.mxu0
        %v1479 = vadd.f32 %v1430, %v1478
        %1480 = vmatmul.bf16.gmra.mxu0 %v1081
        %v1481 = vpop.f32.mrf.mxu0
        %v1482 = vadd.f32 %v1433, %v1481
        %v1483 = vpop.f32.mrf.mxu0
        %v1484 = vadd.f32 %v1435, %v1483
        %1485 = vmatmul.bf16.gmra.mxu0 %v1085
        %v1486 = vpop.f32.mrf.mxu0
        %v1487 = vadd.f32 %v1438, %v1486
        %v1488 = vpop.f32.mrf.mxu0
        %v1489 = vadd.f32 %v1440, %v1488
        %1490 = vmatmul.bf16.gmra.mxu0 %v1089
        %v1491 = vpop.f32.mrf.mxu0
        %v1492 = vadd.f32 %v1443, %v1491
        %v1493 = vpop.f32.mrf.mxu0
        %v1494 = vadd.f32 %v1445, %v1493
        %1495 = vmatmul.bf16.gmra.mxu0 %v1093
        %v1496 = vpop.f32.mrf.mxu0
        %v1497 = vadd.f32 %v1448, %v1496
        %v1498 = vpop.f32.mrf.mxu0
        %v1499 = vadd.f32 %v1450, %v1498
        %1500 = vmatmul.bf16.gmra.mxu0 %v1097
        %v1501 = vpop.f32.mrf.mxu0
        %v1502 = vadd.f32 %v1453, %v1501
        %v1503 = vpop.f32.mrf.mxu0
        %v1504 = vadd.f32 %v1455, %v1503
        %1505 = vdwg.mxu0
        %1506 = vmatpush.bf16.msra.mxu0 %v1326
        %1507 = vmatpush.bf16.msra.mxu0 %v1325
        %1508 = vmatpush.bf16.msra.mxu0 %v1324
        %1509 = vmatpush.bf16.msra.mxu0 %v1323
        %1510 = vmatpush.bf16.msra.mxu0 %v1322
        %1511 = vmatpush.bf16.msra.mxu0 %v1321
        %1512 = vmatpush.bf16.msra.mxu0 %v1320
        %1513 = vmatpush.bf16.msra.mxu0 %v1319
        %1514 = vmatmul.bf16.gmra.mxu0 %v1070
        %v1515 = vpop.f32.mrf.mxu0
        %v1516 = vadd.f32 %v1467, %v1515
        %v1517 = vpop.f32.mrf.mxu0
        %v1518 = vadd.f32 %v1469, %v1517
        %1519 = vmatmul.bf16.gmra.mxu0 %v1074
        %v1520 = vpop.f32.mrf.mxu0
        %v1521 = vadd.f32 %v1472, %v1520
        %v1522 = vpop.f32.mrf.mxu0
        %v1523 = vadd.f32 %v1474, %v1522
        %1524 = vmatmul.bf16.gmra.mxu0 %v1078
        %v1525 = vpop.f32.mrf.mxu0
        %v1526 = vadd.f32 %v1477, %v1525
        %v1527 = vpop.f32.mrf.mxu0
        %v1528 = vadd.f32 %v1479, %v1527
        %1529 = vmatmul.bf16.gmra.mxu0 %v1082
        %v1530 = vpop.f32.mrf.mxu0
        %v1531 = vadd.f32 %v1482, %v1530
        %v1532 = vpop.f32.mrf.mxu0
        %v1533 = vadd.f32 %v1484, %v1532
        %1534 = vmatmul.bf16.gmra.mxu0 %v1086
        %v1535 = vpop.f32.mrf.mxu0
        %v1536 = vadd.f32 %v1487, %v1535
        %v1537 = vpop.f32.mrf.mxu0
        %v1538 = vadd.f32 %v1489, %v1537
        %1539 = vmatmul.bf16.gmra.mxu0 %v1090
        %v1540 = vpop.f32.mrf.mxu0
        %v1541 = vadd.f32 %v1492, %v1540
        %v1542 = vpop.f32.mrf.mxu0
        %v1543 = vadd.f32 %v1494, %v1542
        %1544 = vmatmul.bf16.gmra.mxu0 %v1094
        %v1545 = vpop.f32.mrf.mxu0
        %v1546 = vadd.f32 %v1497, %v1545
        %v1547 = vpop.f32.mrf.mxu0
        %v1548 = vadd.f32 %v1499, %v1547
        %1549 = vmatmul.bf16.gmra.mxu0 %v1098
        %v1550 = vpop.f32.mrf.mxu0
        %v1551 = vadd.f32 %v1502, %v1550
        %v1552 = vpop.f32.mrf.mxu0
        %v1553 = vadd.f32 %v1504, %v1552
        %1554 = vdwg.mxu0
        %v1555 = vmax.f32 %v1516, 0.0
        %v1556 = vmax.f32 %v1518, 0.0
        %v1557 = vmax.f32 %v1521, 0.0
        %v1558 = vmax.f32 %v1523, 0.0
        %v1559 = vmax.f32 %v1526, 0.0
        %v1560 = vmax.f32 %v1528, 0.0
        %v1561 = vmax.f32 %v1531, 0.0
        %v1562 = vmax.f32 %v1533, 0.0
        %v1563 = vmax.f32 %v1536, 0.0
        %v1564 = vmax.f32 %v1538, 0.0
        %v1565 = vmax.f32 %v1541, 0.0
        %v1566 = vmax.f32 %v1543, 0.0
        %v1567 = vmax.f32 %v1546, 0.0
        %v1568 = vmax.f32 %v1548, 0.0
        %v1569 = vmax.f32 %v1551, 0.0
        %v1570 = vmax.f32 %v1553, 0.0
        %v1571 = vmin.f32 %v1555, 6.0
        %v1572 = vmin.f32 %v1556, 6.0
        %v1573 = vmin.f32 %v1557, 6.0
        %v1574 = vmin.f32 %v1558, 6.0
        %v1575 = vmin.f32 %v1559, 6.0
        %v1576 = vmin.f32 %v1560, 6.0
        %v1577 = vmin.f32 %v1561, 6.0
        %v1578 = vmin.f32 %v1562, 6.0
        %v1579 = vmin.f32 %v1563, 6.0
        %v1580 = vmin.f32 %v1564, 6.0
        %v1581 = vmin.f32 %v1565, 6.0
        %v1582 = vmin.f32 %v1566, 6.0
        %v1583 = vmin.f32 %v1567, 6.0
        %v1584 = vmin.f32 %v1568, 6.0
        %v1585 = vmin.f32 %v1569, 6.0
        %v1586 = vmin.f32 %v1570, 6.0
        %v1587 = vpack.c.bf16 %v1572, %v1571
        %v1588 = vpack.c.bf16 %v1574, %v1573
        %v1589 = vpack.c.bf16 %v1576, %v1575
        %v1590 = vpack.c.bf16 %v1578, %v1577
        %v1591 = vpack.c.bf16 %v1580, %v1579
        %v1592 = vpack.c.bf16 %v1582, %v1581
        %v1593 = vpack.c.bf16 %v1584, %v1583
        %v1594 = vpack.c.bf16 %v1586, %v1585
        %v1595 = vld [vmem:[%s7] sm:$0xf]
        %v1596 = vld [vmem:[%s7 + $0x4] sm:$0xf]
        %v1597 = vld [vmem:[%s7 + $0x8] sm:$0xf]
        %v1598 = vld [vmem:[%s7 + $0xc] sm:$0xf]
        %v1599 = vld [vmem:[%s7 + $0x10] sm:$0xf]
        %v1600 = vld [vmem:[%s7 + $0x14] sm:$0xf]
        %v1601 = vld [vmem:[%s7 + $0x18] sm:$0xf]
        %v1602 = vld [vmem:[%s7 + $0x1c] sm:$0xf]
        %v1603 = vld [vmem:[%s7 + $0x20] sm:$0xf]
        %v1604 = vld [vmem:[%s7 + $0x24] sm:$0xf]
        %v1605 = vld [vmem:[%s7 + $0x28] sm:$0xf]
        %v1606 = vld [vmem:[%s7 + $0x2c] sm:$0xf]
        %v1607 = vld [vmem:[%s7 + $0x30] sm:$0xf]
        %v1608 = vld [vmem:[%s7 + $0x34] sm:$0xf]
        %v1609 = vld [vmem:[%s7 + $0x38] sm:$0xf]
        %v1610 = vld [vmem:[%s7 + $0x3c] sm:$0xf]
        %v1611 = vld [vmem:[%s8] sm:$0x1]
        %v1613 = vperm.slane %v1611, 0
        %v1631 = vunpack.c.l.b16 %v1595
        %v1632 = vunpack.c.l.b16 %v1596
        %v1633 = vunpack.c.l.b16 %v1597
        %v1634 = vunpack.c.l.b16 %v1598
        %v1635 = vunpack.c.l.b16 %v1599
        %v1636 = vunpack.c.l.b16 %v1600
        %v1637 = vunpack.c.l.b16 %v1601
        %v1638 = vunpack.c.l.b16 %v1602
        %v1639 = vunpack.c.l.b16 %v1603
        %v1640 = vunpack.c.l.b16 %v1604
        %v1641 = vunpack.c.l.b16 %v1605
        %v1642 = vunpack.c.l.b16 %v1606
        %v1643 = vunpack.c.l.b16 %v1607
        %v1644 = vunpack.c.l.b16 %v1608
        %v1645 = vunpack.c.l.b16 %v1609
        %v1646 = vunpack.c.l.b16 %v1610
        %v1647 = vpack.c.b16 %v1632, %v1631
        %v1648 = vpack.c.b16 %v1634, %v1633
        %v1649 = vpack.c.b16 %v1636, %v1635
        %v1650 = vpack.c.b16 %v1638, %v1637
        %v1651 = vpack.c.b16 %v1640, %v1639
        %v1652 = vpack.c.b16 %v1642, %v1641
        %v1653 = vpack.c.b16 %v1644, %v1643
        %v1654 = vpack.c.b16 %v1646, %v1645
        %1663 = vmatpush.bf16.msra.mxu0 %v1654
        %1664 = vmatpush.bf16.msra.mxu0 %v1653
        %1665 = vmatpush.bf16.msra.mxu0 %v1652
        %1666 = vmatpush.bf16.msra.mxu0 %v1651
        %1667 = vmatpush.bf16.msra.mxu0 %v1650
        %1668 = vmatpush.bf16.msra.mxu0 %v1649
        %1669 = vmatpush.bf16.msra.mxu0 %v1648
        %1670 = vmatpush.bf16.msra.mxu0 %v1647
        %1671 = vmatmul.bf16.gmra.mxu0 %v1587
        %v1672 = vpop.f32.mrf.mxu0
        %v1673 = vadd.f32 %v1613, %v1672
        %v1674 = vpop.f32.mrf.mxu0
        %v1675 = vadd.f32 %v1613, %v1674
        %1676 = vmatmul.bf16.gmra.mxu0 %v1588
        %v1677 = vpop.f32.mrf.mxu0
        %v1678 = vadd.f32 %v1613, %v1677
        %v1679 = vpop.f32.mrf.mxu0
        %v1680 = vadd.f32 %v1613, %v1679
        %1681 = vmatmul.bf16.gmra.mxu0 %v1589
        %v1682 = vpop.f32.mrf.mxu0
        %v1683 = vadd.f32 %v1613, %v1682
        %v1684 = vpop.f32.mrf.mxu0
        %v1685 = vadd.f32 %v1613, %v1684
        %1686 = vmatmul.bf16.gmra.mxu0 %v1590
        %v1687 = vpop.f32.mrf.mxu0
        %v1688 = vadd.f32 %v1613, %v1687
        %v1689 = vpop.f32.mrf.mxu0
        %v1690 = vadd.f32 %v1613, %v1689
        %1691 = vmatmul.bf16.gmra.mxu0 %v1591
        %v1692 = vpop.f32.mrf.mxu0
        %v1693 = vadd.f32 %v1613, %v1692
        %v1694 = vpop.f32.mrf.mxu0
        %v1695 = vadd.f32 %v1613, %v1694
        %1696 = vmatmul.bf16.gmra.mxu0 %v1592
        %v1697 = vpop.f32.mrf.mxu0
        %v1698 = vadd.f32 %v1613, %v1697
        %v1699 = vpop.f32.mrf.mxu0
        %v1700 = vadd.f32 %v1613, %v1699
        %1701 = vmatmul.bf16.gmra.mxu0 %v1593
        %v1702 = vpop.f32.mrf.mxu0
        %v1703 = vadd.f32 %v1613, %v1702
        %v1704 = vpop.f32.mrf.mxu0
        %v1705 = vadd.f32 %v1613, %v1704
        %1706 = vmatmul.bf16.gmra.mxu0 %v1594
        %v1707 = vpop.f32.mrf.mxu0
        %v1708 = vadd.f32 %v1613, %v1707
        %v1709 = vpop.f32.mrf.mxu0
        %v1710 = vadd.f32 %v1613, %v1709
        %1711 = vdwg.mxu0
        %1712 = vst [vmem:[%s374] sm:$0xff] %v1673
        %1713 = vst [vmem:[%s374 + $0x8] sm:$0xff] %v1675
        %1714 = vst [vmem:[%s374 + $0x10] sm:$0xff] %v1678
        %1715 = vst [vmem:[%s374 + $0x18] sm:$0xff] %v1680
        %1716 = vst [vmem:[%s374 + $0x20] sm:$0xff] %v1683
        %1717 = vst [vmem:[%s374 + $0x28] sm:$0xff] %v1685
        %1718 = vst [vmem:[%s374 + $0x30] sm:$0xff] %v1688
        %1719 = vst [vmem:[%s374 + $0x38] sm:$0xff] %v1690
        %1720 = vst [vmem:[%s374 + $0x40] sm:$0xff] %v1693
        %1721 = vst [vmem:[%s374 + $0x48] sm:$0xff] %v1695
        %1722 = vst [vmem:[%s374 + $0x50] sm:$0xff] %v1698
        %1723 = vst [vmem:[%s374 + $0x58] sm:$0xff] %v1700
        %1724 = vst [vmem:[%s374 + $0x60] sm:$0xff] %v1703
        %1725 = vst [vmem:[%s374 + $0x68] sm:$0xff] %v1705
        %1726 = vst [vmem:[%s374 + $0x70] sm:$0xff] %v1708
        %1727 = vst [vmem:[%s374 + $0x78] sm:$0xff] %v1710
        %s1728 = sand.u32 %s227, 1
        %s1729 = scalar_lea.sflag [#allocation4], %s1728
        %s1730 = sand.u32 %s227, 1
        %s1731 = smul.addr %s1730, 128
        %s1732 = scalar_lea.vmem [#allocation8], %s1731
        // Predicated region
        $region69: #{tpu_custom_call.1} parent=55 // pred_check
          %p1733 = pneg %p237
        $region70: #{tpu_custom_call.1} parent=55 // pred_check_branch
          %1735 = sbr.rel (%p1733) target = $region72
        $region71: #{tpu_custom_call.1} parent=55 // pred_region
          %s1736 = smul.u32 16, %s25
          %1738 = vsyncadd %s1729, 0
          %s1739 = smul.addr %s1736, 8
          %s1740 = scalar_lea.hbm %s9, %s1739
          %s1741 = sshll.u32 %s1732, 4
          %s1742 = int_to_ptr.vmem [resolvable:$true] %s1741
          %s1743 = sshll.u32 %s1740, 4
          %s1744 = int_to_ptr.hbm [resolvable:$true] %s1743
          %1749 = dma.vmem_to_hbm [thread:$0]  %s1742, 2048, %s1744, %s1729, 128, 128, 8
        $region72: #{tpu_custom_call.1} parent=55 // pred_fallthru
          _
      $region56: #{tpu_custom_call.1} parent=5 // pred_fallthru
        _
      %p1750 = scmp.le.s32.totalorder 2, %s20
      // Predicated region
      $region73: #{tpu_custom_call.1} parent=5 // pred_check
        %p1751 = pneg %p1750
      $region74: #{tpu_custom_call.1} parent=5 // pred_check_branch
        %1753 = sbr.rel (%p1751) target = $region76
      $region75: #{tpu_custom_call.1} parent=5 // pred_region
        %s1754 = ssub.s32 %s20, 2
        // Predicated region
        $region77: #{tpu_custom_call.1} parent=75 // pred_check
          %p1755 = pneg %p243
        $region78: #{tpu_custom_call.1} parent=75 // pred_check_branch
          %1757 = sbr.rel (%p1755) target = $region80
        $region79: #{tpu_custom_call.1} parent=75 // pred_region
          %s1758 = sand.u32 %s228, 1
          %s1759 = scalar_lea.sflag [#allocation4], %s1758
          %s1760 = sand.u32 %s228, 1
          %s1761 = smul.addr %s1760, 128
          %s1762 = scalar_lea.vmem [#allocation8], %s1761
          %1764 = dma.done %s1759, 2048
        $region80: #{tpu_custom_call.1} parent=75 // pred_fallthru
          _
      $region76: #{tpu_custom_call.1} parent=5 // pred_fallthru
        _
    $region6: #{tpu_custom_call.1} parent=1 // loop_footer
      %s24 = sadd.s32 1, %s20
    $region7: #{tpu_custom_call.1} parent=1 // loop_footer_branch
      %19 = sbr.rel target = $region3
    $region8: #{tpu_custom_call.1} parent=1 // loop_exit
      _
    %1765 = vsyncpa [#allocation3], 1
    %s1766 = scalar_lea.sflag [#allocation3], 1
    %1767 = vsyncpa %s1766, 1
    %1768 = vsyncpa [#allocation6], 1
    %1769 = vsyncpa [#allocation4], 1
    %s1770 = scalar_lea.sflag [#allocation4], 1
    %1771 = vsyncpa %s1770, 1

</llo_original>
